<compile_context>
chip_gen: v5e
topology: v5e:2x2
jax: 0.10.0
libtpu: 0.0.40
codegen_flags: <defaults>
</compile_context>

<pallas_src>
import numpy as np
import jax
import jax.numpy as jnp
from jax.experimental import pallas as pl
from jax.experimental.pallas import tpu as pltpu


def gat_fused_kernel(h_ref, w_ref, ap_ref, adj_ref, out_ref):
    # h_ref:   (N, in_dim)             node features
    # w_ref:   (in_dim, H*out_dim)     fused, pre-transposed fc weights (all heads)
    # ap_ref:  (H*out_dim, 2*H)        block-diagonal attention projection:
    #                                  col h    -> a_src_h . z_h   (source term, per node)
    #                                  col H+h  -> a_dst_h . z_h   (destination term, per node)
    # adj_ref: (N, N)                  adj[i, j] = 1.0 iff edge j -> i
    # out_ref: (N, H*out_dim)          'cat'-merged output
    h = h_ref[...]
    w = w_ref[...]
    ap = ap_ref[...]
    adj = adj_ref[...]

    num_heads = ap.shape[1] // 2
    out_dim = w.shape[1] // num_heads

    # Fused fc across all heads: one MXU matmul, lane width H*out_dim.
    z = jnp.dot(h, w, preferred_element_type=jnp.float32)          # (N, H*out_dim)

    # All heads' src/dst attention terms in one matmul; one XLU transpose for all heads.
    scores = jnp.dot(z, ap, preferred_element_type=jnp.float32)    # (N, 2H)
    scores_t = scores.T                                            # (2H, N)

    mask = adj > 0                                                 # hoisted out of head loop
    neg_inf = jnp.float32(-1e30)

    outs = []
    for hd in range(num_heads):                                    # static, unrolled (H is small)
        el_row = scores_t[hd:hd + 1, :]                            # (1, N)  source term of node j
        er_col = scores[:, num_heads + hd:num_heads + hd + 1]      # (N, 1)  dest term of node i
        # e[i, j] = leaky_relu(a . [z_j ; z_i]) for edge j -> i; leaky-relu folded into mask select.
        e = er_col + el_row                                        # (N, N)
        e = jnp.where(mask, jnp.where(e > 0, e, 0.01 * e), neg_inf)
        # masked softmax over in-neighbors j (DGL mailbox softmax, dim=1)
        m = jnp.max(e, axis=1, keepdims=True)                      # (N, 1)
        p = jnp.exp(e - m)                                         # masked entries underflow to 0
        denom = jnp.sum(p, axis=1, keepdims=True)                  # (N, 1)
        inv = pl.reciprocal(jnp.maximum(denom, jnp.float32(1e-30)), approx=False)
        alpha = p * inv                                            # (N, N)
        zh = z[:, hd * out_dim:(hd + 1) * out_dim]                 # (N, out_dim) static lane slice
        outs.append(jnp.dot(alpha, zh, preferred_element_type=jnp.float32))

    # Single lane-dense store of the concatenated ('cat') multi-head output.
    out_ref[...] = jnp.concatenate(outs, axis=1)                   # (N, H*out_dim)


def multi_head_gat(h, adj, W, A, merge="cat"):
    # h:   (N, in_dim) float32
    # adj: (N, N)      float32 mask, adj[i, j] = 1 iff edge j -> i
    # W:   (H, out_dim, in_dim)   per-head fc.weight
    # A:   (H, 2*out_dim)         per-head attn_fc.weight
    num_heads, out_dim, in_dim = W.shape
    N = h.shape[0]

    # Layout plumbing stays in the wrapper (not in the kernel):
    # fused fc weights: w_fused[:, h*out_dim + d] = W[h, d, :]
    w_fused = jnp.transpose(W, (2, 0, 1)).reshape(in_dim, num_heads * out_dim)
    # block-diagonal attention projection (H*out_dim, 2H)
    a_src = A[:, :out_dim]                                         # (H, out_dim)
    a_dst = A[:, out_dim:]                                         # (H, out_dim)
    eye = jnp.eye(num_heads, dtype=A.dtype)                        # (H, H)
    ap_src = (a_src[:, :, None] * eye[:, None, :]).reshape(num_heads * out_dim, num_heads)
    ap_dst = (a_dst[:, :, None] * eye[:, None, :]).reshape(num_heads * out_dim, num_heads)
    ap = jnp.concatenate([ap_src, ap_dst], axis=1)                 # (H*out_dim, 2H)

    head_cat = pl.pallas_call(
        gat_fused_kernel,
        out_shape=jax.ShapeDtypeStruct((N, num_heads * out_dim), jnp.float32),
        grid_spec=pltpu.PrefetchScalarGridSpec(
            num_scalar_prefetch=0,
            grid=(1,),
            in_specs=[
                pl.BlockSpec((N, in_dim), lambda i: (0, 0)),                           # h
                pl.BlockSpec((in_dim, num_heads * out_dim), lambda i: (0, 0)),         # fused W
                pl.BlockSpec((num_heads * out_dim, 2 * num_heads), lambda i: (0, 0)),  # attn proj
                pl.BlockSpec((N, N), lambda i: (0, 0)),                                # adj
            ],
            out_specs=pl.BlockSpec((N, num_heads * out_dim), lambda i: (0, 0)),
        ),
        compiler_params=pltpu.CompilerParams(dimension_semantics=("arbitrary",)),
    )(h, w_fused, ap, adj)

    if merge == "cat":
        # torch.cat(head_outs, dim=1): the kernel already emits (N, H*out_dim) in head order.
        return head_cat
    else:
        # torch.mean(torch.stack(head_outs)) -> scalar
        return jnp.mean(head_cat)


def xavier_normal(key, shape, gain):
    # nn.init.xavier_normal_ with gain = calculate_gain('relu') = sqrt(2)
    fan_out, fan_in = shape[-2], shape[-1]
    std = gain * np.sqrt(2.0 / (fan_in + fan_out))
    return std * jax.random.normal(key, shape, dtype=jnp.float32)


def make_adjacency(n, p, seed):
    # Random symmetric (bidirectional-edge) adjacency mask, no self loops,
    # every node guaranteed at least one neighbor (stands in for the connected
    # random graph used in the original script; edge weights are unused by GAT).
    # TODO(synk): the original uses Sage's graphs.RandomGNP + connectivity retry; here we
    # build an equivalent dense mask directly in numpy.
    rng = np.random.RandomState(seed)
    upper = (rng.random_sample((n, n)) < p).astype(np.float32)
    upper = np.triu(upper, k=1)
    adj = upper + upper.T
    for i in range(n):
        if adj[i].sum() == 0:
            j = (i + 1) % n
            adj[i, j] = 1.0
            adj[j, i] = 1.0
    return adj


def reference_multi_head_gat(h, adj, W, A):
    # pure-JAX reference for correctness checking (mirrors the PyTorch module per head)
    outs = []
    for hd in range(W.shape[0]):
        z = h @ W[hd].T
        out_dim = z.shape[1]
        el = z @ A[hd, :out_dim]
        er = z @ A[hd, out_dim:]
        e = er[:, None] + el[None, :]
        e = jnp.where(e > 0, e, 0.01 * e)
        e = jnp.where(adj > 0, e, -1e30)
        m = jnp.max(e, axis=1, keepdims=True)
        p = jnp.exp(e - m) * adj
        alpha = p / jnp.sum(p, axis=1, keepdims=True)
        outs.append(alpha @ z)
    return jnp.concatenate(outs, axis=1)


if __name__ == "__main__":
    N = 64          # number of graph nodes (small, TPU-friendly; original script uses 50)
    in_dim = 16
    out_dim = 8
    num_heads = 4
    gain = float(np.sqrt(2.0))   # nn.init.calculate_gain('relu')

    key = jax.random.PRNGKey(0)
    k_h, k_w, k_a = jax.random.split(key, 3)

    h = jax.random.normal(k_h, (N, in_dim), dtype=jnp.float32)
    W = xavier_normal(k_w, (num_heads, out_dim, in_dim), gain)        # fc.weight per head
    A = xavier_normal(k_a, (num_heads, 1, 2 * out_dim), gain)[:, 0]   # attn_fc.weight per head -> (H, 2*out_dim)
    adj = jnp.asarray(make_adjacency(N, 0.4, seed=2020))

    out = multi_head_gat(h, adj, W, A, merge="cat")
    out = jax.block_until_ready(out)

    ref = reference_multi_head_gat(h, adj, W, A)
    assert out.shape == (N, num_heads * out_dim)
    np.testing.assert_allclose(np.asarray(out), np.asarray(ref), rtol=1e-5, atol=1e-5)

    print("KERNEL_OK")
</pallas_src>

<mosaic_0001>
module attributes {stable_mosaic.version = 11 : i64} {
  func.func @gat_fused_kernel(%arg0: i32, %arg1: memref<64x16xf32, #tpu.memory_space<vmem>>, %arg2: memref<16x32xf32, #tpu.memory_space<vmem>>, %arg3: memref<32x8xf32, #tpu.memory_space<vmem>>, %arg4: memref<64x64xf32, #tpu.memory_space<vmem>>, %arg5: memref<64x32xf32, #tpu.memory_space<vmem>>) attributes {dimension_semantics = [#tpu.dimension_semantics<arbitrary>], iteration_bounds = array<i64: 1>, scalar_prefetch = 0 : i64, scratch_operands = 0 : i64, tpu.core_type = #tpu.core_type<tc>, window_params = [{pipeline_mode = #tpu.pipeline_mode<synchronous>, transform_indices = @transform_0, window_bounds = array<i64: 64, 16>}, {pipeline_mode = #tpu.pipeline_mode<synchronous>, transform_indices = @transform_1, window_bounds = array<i64: 16, 32>}, {pipeline_mode = #tpu.pipeline_mode<synchronous>, transform_indices = @transform_2, window_bounds = array<i64: 32, 8>}, {pipeline_mode = #tpu.pipeline_mode<synchronous>, transform_indices = @transform_3, window_bounds = array<i64: 64, 64>}, {pipeline_mode = #tpu.pipeline_mode<synchronous>, transform_indices = @transform_4, window_bounds = array<i64: 64, 32>}]} {
    %c0 = arith.constant 0 : index
    %c0_0 = arith.constant 0 : index
    %0 = vector.load %arg1[%c0, %c0_0] : memref<64x16xf32, #tpu.memory_space<vmem>>, vector<64x16xf32>
    %c0_1 = arith.constant 0 : index
    %c0_2 = arith.constant 0 : index
    %1 = vector.load %arg2[%c0_1, %c0_2] : memref<16x32xf32, #tpu.memory_space<vmem>>, vector<16x32xf32>
    %c0_3 = arith.constant 0 : index
    %c0_4 = arith.constant 0 : index
    %2 = vector.load %arg3[%c0_3, %c0_4] : memref<32x8xf32, #tpu.memory_space<vmem>>, vector<32x8xf32>
    %c0_5 = arith.constant 0 : index
    %c0_6 = arith.constant 0 : index
    %3 = vector.load %arg4[%c0_5, %c0_6] : memref<64x64xf32, #tpu.memory_space<vmem>>, vector<64x64xf32>
    %cst = arith.constant dense<0.000000e+00> : vector<64x32xf32>
    %4 = tpu.matmul %0, %1, %cst {dimension_numbers = #tpu.dot_dimension_numbers<[1], [0], [0], [1], [0, 0, 1, 1], [], []>} : vector<64x16xf32>, vector<16x32xf32>, vector<64x32xf32> -> vector<64x32xf32>
    %cst_7 = arith.constant dense<0.000000e+00> : vector<64x8xf32>
    %5 = tpu.matmul %4, %2, %cst_7 {dimension_numbers = #tpu.dot_dimension_numbers<[1], [0], [0], [1], [0, 0, 1, 1], [], []>} : vector<64x32xf32>, vector<32x8xf32>, vector<64x8xf32> -> vector<64x8xf32>
    %6 = tpu.transpose %5, [1, 0] : vector<64x8xf32> -> vector<8x64xf32>
    %cst_8 = arith.constant 0.000000e+00 : f32
    %7 = vector.broadcast %cst_8 : f32 to vector<64x64xf32>
    %8 = arith.cmpf ogt, %3, %7 : vector<64x64xf32>
    %9 = vector.extract_strided_slice %6 {offsets = [0, 0], sizes = [1, 64], strides = [1, 1]} : vector<8x64xf32> to vector<1x64xf32>
    %10 = vector.extract_strided_slice %5 {offsets = [0, 4], sizes = [64, 1], strides = [1, 1]} : vector<64x8xf32> to vector<64x1xf32>
    %11 = vector.broadcast %10 : vector<64x1xf32> to vector<64x64xf32>
    %12 = vector.broadcast %9 : vector<1x64xf32> to vector<64x64xf32>
    %13 = arith.addf %11, %12 : vector<64x64xf32>
    %cst_9 = arith.constant 0.000000e+00 : f32
    %14 = vector.broadcast %cst_9 : f32 to vector<64x64xf32>
    %15 = arith.cmpf ogt, %13, %14 : vector<64x64xf32>
    %cst_10 = arith.constant 0.00999999977 : f32
    %16 = vector.broadcast %cst_10 : f32 to vector<64x64xf32>
    %17 = arith.mulf %16, %13 : vector<64x64xf32>
    %18 = arith.select %15, %13, %17 : vector<64x64xi1>, vector<64x64xf32>
    %cst_11 = arith.constant -1.000000e+30 : f32
    %19 = vector.broadcast %cst_11 : f32 to vector<64x64xf32>
    %20 = arith.select %8, %18, %19 : vector<64x64xi1>, vector<64x64xf32>
    %cst_12 = arith.constant dense<0xFF800000> : vector<64xf32>
    %21 = vector.multi_reduction <maximumf>, %20, %cst_12 [1] : vector<64x64xf32> to vector<64xf32>
    %22 = vector.shape_cast %21 : vector<64xf32> to vector<64x1xf32>
    %23 = vector.broadcast %22 : vector<64x1xf32> to vector<64x64xf32>
    %24 = arith.subf %20, %23 : vector<64x64xf32>
    %25 = math.exp %24 : vector<64x64xf32>
    %cst_13 = arith.constant dense<0.000000e+00> : vector<64xf32>
    %26 = vector.multi_reduction <add>, %25, %cst_13 [1] : vector<64x64xf32> to vector<64xf32>
    %27 = vector.shape_cast %26 : vector<64xf32> to vector<64x1xf32>
    %cst_14 = arith.constant 1.000000e-30 : f32
    %28 = vector.broadcast %cst_14 : f32 to vector<64x1xf32>
    %29 = arith.maximumf %27, %28 : vector<64x1xf32>
    %30 = tpu.reciprocal %29 : vector<64x1xf32> -> vector<64x1xf32>
    %31 = vector.broadcast %30 : vector<64x1xf32> to vector<64x64xf32>
    %32 = arith.mulf %25, %31 : vector<64x64xf32>
    %33 = vector.extract_strided_slice %4 {offsets = [0, 0], sizes = [64, 8], strides = [1, 1]} : vector<64x32xf32> to vector<64x8xf32>
    %cst_15 = arith.constant dense<0.000000e+00> : vector<64x8xf32>
    %34 = tpu.matmul %32, %33, %cst_15 {dimension_numbers = #tpu.dot_dimension_numbers<[1], [0], [0], [1], [0, 0, 1, 1], [], []>} : vector<64x64xf32>, vector<64x8xf32>, vector<64x8xf32> -> vector<64x8xf32>
    %35 = vector.extract_strided_slice %6 {offsets = [1, 0], sizes = [1, 64], strides = [1, 1]} : vector<8x64xf32> to vector<1x64xf32>
    %36 = vector.extract_strided_slice %5 {offsets = [0, 5], sizes = [64, 1], strides = [1, 1]} : vector<64x8xf32> to vector<64x1xf32>
    %37 = vector.broadcast %36 : vector<64x1xf32> to vector<64x64xf32>
    %38 = vector.broadcast %35 : vector<1x64xf32> to vector<64x64xf32>
    %39 = arith.addf %37, %38 : vector<64x64xf32>
    %cst_16 = arith.constant 0.000000e+00 : f32
    %40 = vector.broadcast %cst_16 : f32 to vector<64x64xf32>
    %41 = arith.cmpf ogt, %39, %40 : vector<64x64xf32>
    %cst_17 = arith.constant 0.00999999977 : f32
    %42 = vector.broadcast %cst_17 : f32 to vector<64x64xf32>
    %43 = arith.mulf %42, %39 : vector<64x64xf32>
    %44 = arith.select %41, %39, %43 : vector<64x64xi1>, vector<64x64xf32>
    %cst_18 = arith.constant -1.000000e+30 : f32
    %45 = vector.broadcast %cst_18 : f32 to vector<64x64xf32>
    %46 = arith.select %8, %44, %45 : vector<64x64xi1>, vector<64x64xf32>
    %cst_19 = arith.constant dense<0xFF800000> : vector<64xf32>
    %47 = vector.multi_reduction <maximumf>, %46, %cst_19 [1] : vector<64x64xf32> to vector<64xf32>
    %48 = vector.shape_cast %47 : vector<64xf32> to vector<64x1xf32>
    %49 = vector.broadcast %48 : vector<64x1xf32> to vector<64x64xf32>
    %50 = arith.subf %46, %49 : vector<64x64xf32>
    %51 = math.exp %50 : vector<64x64xf32>
    %cst_20 = arith.constant dense<0.000000e+00> : vector<64xf32>
    %52 = vector.multi_reduction <add>, %51, %cst_20 [1] : vector<64x64xf32> to vector<64xf32>
    %53 = vector.shape_cast %52 : vector<64xf32> to vector<64x1xf32>
    %cst_21 = arith.constant 1.000000e-30 : f32
    %54 = vector.broadcast %cst_21 : f32 to vector<64x1xf32>
    %55 = arith.maximumf %53, %54 : vector<64x1xf32>
    %56 = tpu.reciprocal %55 : vector<64x1xf32> -> vector<64x1xf32>
    %57 = vector.broadcast %56 : vector<64x1xf32> to vector<64x64xf32>
    %58 = arith.mulf %51, %57 : vector<64x64xf32>
    %59 = vector.extract_strided_slice %4 {offsets = [0, 8], sizes = [64, 8], strides = [1, 1]} : vector<64x32xf32> to vector<64x8xf32>
    %cst_22 = arith.constant dense<0.000000e+00> : vector<64x8xf32>
    %60 = tpu.matmul %58, %59, %cst_22 {dimension_numbers = #tpu.dot_dimension_numbers<[1], [0], [0], [1], [0, 0, 1, 1], [], []>} : vector<64x64xf32>, vector<64x8xf32>, vector<64x8xf32> -> vector<64x8xf32>
    %61 = vector.extract_strided_slice %6 {offsets = [2, 0], sizes = [1, 64], strides = [1, 1]} : vector<8x64xf32> to vector<1x64xf32>
    %62 = vector.extract_strided_slice %5 {offsets = [0, 6], sizes = [64, 1], strides = [1, 1]} : vector<64x8xf32> to vector<64x1xf32>
    %63 = vector.broadcast %62 : vector<64x1xf32> to vector<64x64xf32>
    %64 = vector.broadcast %61 : vector<1x64xf32> to vector<64x64xf32>
    %65 = arith.addf %63, %64 : vector<64x64xf32>
    %cst_23 = arith.constant 0.000000e+00 : f32
    %66 = vector.broadcast %cst_23 : f32 to vector<64x64xf32>
    %67 = arith.cmpf ogt, %65, %66 : vector<64x64xf32>
    %cst_24 = arith.constant 0.00999999977 : f32
    %68 = vector.broadcast %cst_24 : f32 to vector<64x64xf32>
    %69 = arith.mulf %68, %65 : vector<64x64xf32>
    %70 = arith.select %67, %65, %69 : vector<64x64xi1>, vector<64x64xf32>
    %cst_25 = arith.constant -1.000000e+30 : f32
    %71 = vector.broadcast %cst_25 : f32 to vector<64x64xf32>
    %72 = arith.select %8, %70, %71 : vector<64x64xi1>, vector<64x64xf32>
    %cst_26 = arith.constant dense<0xFF800000> : vector<64xf32>
    %73 = vector.multi_reduction <maximumf>, %72, %cst_26 [1] : vector<64x64xf32> to vector<64xf32>
    %74 = vector.shape_cast %73 : vector<64xf32> to vector<64x1xf32>
    %75 = vector.broadcast %74 : vector<64x1xf32> to vector<64x64xf32>
    %76 = arith.subf %72, %75 : vector<64x64xf32>
    %77 = math.exp %76 : vector<64x64xf32>
    %cst_27 = arith.constant dense<0.000000e+00> : vector<64xf32>
    %78 = vector.multi_reduction <add>, %77, %cst_27 [1] : vector<64x64xf32> to vector<64xf32>
    %79 = vector.shape_cast %78 : vector<64xf32> to vector<64x1xf32>
    %cst_28 = arith.constant 1.000000e-30 : f32
    %80 = vector.broadcast %cst_28 : f32 to vector<64x1xf32>
    %81 = arith.maximumf %79, %80 : vector<64x1xf32>
    %82 = tpu.reciprocal %81 : vector<64x1xf32> -> vector<64x1xf32>
    %83 = vector.broadcast %82 : vector<64x1xf32> to vector<64x64xf32>
    %84 = arith.mulf %77, %83 : vector<64x64xf32>
    %85 = vector.extract_strided_slice %4 {offsets = [0, 16], sizes = [64, 8], strides = [1, 1]} : vector<64x32xf32> to vector<64x8xf32>
    %cst_29 = arith.constant dense<0.000000e+00> : vector<64x8xf32>
    %86 = tpu.matmul %84, %85, %cst_29 {dimension_numbers = #tpu.dot_dimension_numbers<[1], [0], [0], [1], [0, 0, 1, 1], [], []>} : vector<64x64xf32>, vector<64x8xf32>, vector<64x8xf32> -> vector<64x8xf32>
    %87 = vector.extract_strided_slice %6 {offsets = [3, 0], sizes = [1, 64], strides = [1, 1]} : vector<8x64xf32> to vector<1x64xf32>
    %88 = vector.extract_strided_slice %5 {offsets = [0, 7], sizes = [64, 1], strides = [1, 1]} : vector<64x8xf32> to vector<64x1xf32>
    %89 = vector.broadcast %88 : vector<64x1xf32> to vector<64x64xf32>
    %90 = vector.broadcast %87 : vector<1x64xf32> to vector<64x64xf32>
    %91 = arith.addf %89, %90 : vector<64x64xf32>
    %cst_30 = arith.constant 0.000000e+00 : f32
    %92 = vector.broadcast %cst_30 : f32 to vector<64x64xf32>
    %93 = arith.cmpf ogt, %91, %92 : vector<64x64xf32>
    %cst_31 = arith.constant 0.00999999977 : f32
    %94 = vector.broadcast %cst_31 : f32 to vector<64x64xf32>
    %95 = arith.mulf %94, %91 : vector<64x64xf32>
    %96 = arith.select %93, %91, %95 : vector<64x64xi1>, vector<64x64xf32>
    %cst_32 = arith.constant -1.000000e+30 : f32
    %97 = vector.broadcast %cst_32 : f32 to vector<64x64xf32>
    %98 = arith.select %8, %96, %97 : vector<64x64xi1>, vector<64x64xf32>
    %cst_33 = arith.constant dense<0xFF800000> : vector<64xf32>
    %99 = vector.multi_reduction <maximumf>, %98, %cst_33 [1] : vector<64x64xf32> to vector<64xf32>
    %100 = vector.shape_cast %99 : vector<64xf32> to vector<64x1xf32>
    %101 = vector.broadcast %100 : vector<64x1xf32> to vector<64x64xf32>
    %102 = arith.subf %98, %101 : vector<64x64xf32>
    %103 = math.exp %102 : vector<64x64xf32>
    %cst_34 = arith.constant dense<0.000000e+00> : vector<64xf32>
    %104 = vector.multi_reduction <add>, %103, %cst_34 [1] : vector<64x64xf32> to vector<64xf32>
    %105 = vector.shape_cast %104 : vector<64xf32> to vector<64x1xf32>
    %cst_35 = arith.constant 1.000000e-30 : f32
    %106 = vector.broadcast %cst_35 : f32 to vector<64x1xf32>
    %107 = arith.maximumf %105, %106 : vector<64x1xf32>
    %108 = tpu.reciprocal %107 : vector<64x1xf32> -> vector<64x1xf32>
    %109 = vector.broadcast %108 : vector<64x1xf32> to vector<64x64xf32>
    %110 = arith.mulf %103, %109 : vector<64x64xf32>
    %111 = vector.extract_strided_slice %4 {offsets = [0, 24], sizes = [64, 8], strides = [1, 1]} : vector<64x32xf32> to vector<64x8xf32>
    %cst_36 = arith.constant dense<0.000000e+00> : vector<64x8xf32>
    %112 = tpu.matmul %110, %111, %cst_36 {dimension_numbers = #tpu.dot_dimension_numbers<[1], [0], [0], [1], [0, 0, 1, 1], [], []>} : vector<64x64xf32>, vector<64x8xf32>, vector<64x8xf32> -> vector<64x8xf32>
    %113 = tpu.concatenate %34, %60, %86, %112 in 1 : vector<64x8xf32>, vector<64x8xf32>, vector<64x8xf32>, vector<64x8xf32> -> vector<64x32xf32>
    %c0_37 = arith.constant 0 : index
    %c0_38 = arith.constant 0 : index
    %114 = vector.load %arg5[%c0_37, %c0_38] : memref<64x32xf32, #tpu.memory_space<vmem>>, vector<64x32xf32>
    tpu.vector_store %arg5[%c0_37, %c0_38], %113 {strides = array<i32>} : memref<64x32xf32, #tpu.memory_space<vmem>>, vector<64x32xf32>,
    return
  }
  func.func @transform_0(%arg0: i32) -> (i32, i32) {
    %c0_i32 = arith.constant 0 : i32
    %c0_i32_0 = arith.constant 0 : i32
    %c0_i32_1 = arith.constant 0 : i32
    return %c0_i32, %c0_i32_0 : i32, i32
  }
  func.func @transform_1(%arg0: i32) -> (i32, i32) {
    %c0_i32 = arith.constant 0 : i32
    %c0_i32_0 = arith.constant 0 : i32
    %c0_i32_1 = arith.constant 0 : i32
    return %c0_i32, %c0_i32_0 : i32, i32
  }
  func.func @transform_2(%arg0: i32) -> (i32, i32) {
    %c0_i32 = arith.constant 0 : i32
    %c0_i32_0 = arith.constant 0 : i32
    %c0_i32_1 = arith.constant 0 : i32
    return %c0_i32, %c0_i32_0 : i32, i32
  }
  func.func @transform_3(%arg0: i32) -> (i32, i32) {
    %c0_i32 = arith.constant 0 : i32
    %c0_i32_0 = arith.constant 0 : i32
    %c0_i32_1 = arith.constant 0 : i32
    return %c0_i32, %c0_i32_0 : i32, i32
  }
  func.func @transform_4(%arg0: i32) -> (i32, i32) {
    %c0_i32 = arith.constant 0 : i32
    %c0_i32_0 = arith.constant 0 : i32
    %c0_i32_1 = arith.constant 0 : i32
    return %c0_i32, %c0_i32_0 : i32, i32
  }
}

</mosaic_0001>

<llo_original>
// kernel: tpu_custom_call.1
$region0: #{tpu_custom_call.1}
  #allocation0 [shape = 'u32[]', space=smem, size = 0x4, offset = 0x4, fixed_abs, tag = 'smem constant byte address 0x4 - core index']
  #allocation1 [shape = 'u32[72,128]{1,0:T(1,128)}', space=vmem, size = 0x9000, scoped, tag = 'internal scratch']
  %s0 = inlined_call_operand.vmem [shape: f32[64,16], index: 0, kind: input, shape index: {}]
  %s1 = inlined_call_operand.vmem [shape: f32[16,32], index: 1, kind: input, shape index: {}]
  %s2 = inlined_call_operand.vmem [shape: f32[32,8], index: 2, kind: input, shape index: {}]
  %s3 = inlined_call_operand.vmem [shape: f32[64,64], index: 3, kind: input, shape index: {}]
  %s4 = inlined_call_operand.vmem [shape: f32[64,32], index: 4, kind: output, shape index: {}]
  %s5 = sld [smem:[#allocation0]]
  $region26: #{tpu_custom_call.1} parent=0
    _
  %s7 = ssub.s32 1, %s5
  %s8 = scalar_select 0, %s7, %s5
  // Predicated region
  $region2: #{tpu_custom_call.1} parent=0 // pred_check
    _
  $region3: #{tpu_custom_call.1} parent=0 // pred_check_branch
    %10 = sbr.rel (0) target = $region5
  $region4: #{tpu_custom_call.1} parent=0 // pred_region
    _
  $region5: #{tpu_custom_call.1} parent=0 // pred_fallthru
    _
  // Predicated region
  $region6: #{tpu_custom_call.1} parent=0 // pred_check
    _
  $region7: #{tpu_custom_call.1} parent=0 // pred_check_branch
    %12 = sbr.rel (0) target = $region9
  $region8: #{tpu_custom_call.1} parent=0 // pred_region
    _
  $region9: #{tpu_custom_call.1} parent=0 // pred_fallthru
    _
  // Predicated region
  $region10: #{tpu_custom_call.1} parent=0 // pred_check
    _
  $region11: #{tpu_custom_call.1} parent=0 // pred_check_branch
    %14 = sbr.rel (0) target = $region13
  $region12: #{tpu_custom_call.1} parent=0 // pred_region
    _
  $region13: #{tpu_custom_call.1} parent=0 // pred_fallthru
    _
  // Predicated region
  $region14: #{tpu_custom_call.1} parent=0 // pred_check
    _
  $region15: #{tpu_custom_call.1} parent=0 // pred_check_branch
    %16 = sbr.rel (0) target = $region17
  $region16: #{tpu_custom_call.1} parent=0 // pred_region
    _
  $region17: #{tpu_custom_call.1} parent=0 // pred_fallthru
    _
  %v17 = vld [vmem:[%s0] sm:$0xff]
  %v18 = vld [vmem:[%s0 + $0x8] sm:$0xff]
  %v19 = vld [vmem:[%s0 + $0x10] sm:$0xff]
  %v20 = vld [vmem:[%s0 + $0x18] sm:$0xff]
  %v21 = vld [vmem:[%s0 + $0x20] sm:$0xff]
  %v22 = vld [vmem:[%s0 + $0x28] sm:$0xff]
  %v23 = vld [vmem:[%s0 + $0x30] sm:$0xff]
  %v24 = vld [vmem:[%s0 + $0x38] sm:$0xff]
  %v25 = vld [vmem:[%s1] sm:$0xff]
  %v26 = vld [vmem:[%s1 + $0x8] sm:$0xff]
  %v27 = vld [vmem:[%s2] sm:$0xff]
  %v28 = vld [vmem:[%s2 + $0x8] sm:$0xff]
  %v29 = vld [vmem:[%s2 + $0x10] sm:$0xff]
  %v30 = vld [vmem:[%s2 + $0x18] sm:$0xff]
  %v31 = vld [vmem:[%s3] sm:$0xff]
  %v32 = vld [vmem:[%s3 + $0x8] sm:$0xff]
  %v33 = vld [vmem:[%s3 + $0x10] sm:$0xff]
  %v34 = vld [vmem:[%s3 + $0x18] sm:$0xff]
  %v35 = vld [vmem:[%s3 + $0x20] sm:$0xff]
  %v36 = vld [vmem:[%s3 + $0x28] sm:$0xff]
  %v37 = vld [vmem:[%s3 + $0x30] sm:$0xff]
  %v38 = vld [vmem:[%s3 + $0x38] sm:$0xff]
  %vm39 = vcmask 130048
  %v41 = vsel %vm39, %v17, 0
  %v44 = vsel %vm39, %v18, 0
  %v47 = vsel %vm39, %v19, 0
  %v50 = vsel %vm39, %v20, 0
  %v53 = vsel %vm39, %v21, 0
  %v56 = vsel %vm39, %v22, 0
  %v59 = vsel %vm39, %v23, 0
  %v62 = vsel %vm39, %v24, 0
  %64 = vmatpush.msra.mxu0 0.0
  %65 = vmatpush.msra.mxu0 0.0
  %66 = vmatpush.msra.mxu0 0.0
  %67 = vmatpush.msra.mxu0 0.0
  %68 = vmatpush.msra.mxu0 0.0
  %69 = vmatpush.msra.mxu0 0.0
  %70 = vmatpush.msra.mxu0 0.0
  %71 = vmatpush.msra.mxu0 0.0
  %72 = vmatpush.msra.mxu0 0.0
  %73 = vmatpush.msra.mxu0 0.0
  %74 = vmatpush.msra.mxu0 0.0
  %75 = vmatpush.msra.mxu0 0.0
  %76 = vmatpush.msra.mxu0 0.0
  %77 = vmatpush.msra.mxu0 0.0
  %78 = vmatpush.msra.mxu0 %v26
  %79 = vmatpush.msra.mxu0 %v25
  %80 = vmatmul.f32.gmra.mxu0 %v41
  %v81 = vpop.f32.mrf.mxu0
  %v82 = vadd.f32 0.0, %v81
  %83 = vmatmul.f32.gmra.mxu0 %v44
  %v84 = vpop.f32.mrf.mxu0
  %v85 = vadd.f32 0.0, %v84
  %86 = vmatmul.f32.gmra.mxu0 %v47
  %v87 = vpop.f32.mrf.mxu0
  %v88 = vadd.f32 0.0, %v87
  %89 = vmatmul.f32.gmra.mxu0 %v50
  %v90 = vpop.f32.mrf.mxu0
  %v91 = vadd.f32 0.0, %v90
  %92 = vmatmul.f32.gmra.mxu0 %v53
  %v93 = vpop.f32.mrf.mxu0
  %v94 = vadd.f32 0.0, %v93
  %95 = vmatmul.f32.gmra.mxu0 %v56
  %v96 = vpop.f32.mrf.mxu0
  %v97 = vadd.f32 0.0, %v96
  %98 = vmatmul.f32.gmra.mxu0 %v59
  %v99 = vpop.f32.mrf.mxu0
  %v100 = vadd.f32 0.0, %v99
  %101 = vmatmul.f32.gmra.mxu0 %v62
  %v102 = vpop.f32.mrf.mxu0
  %v103 = vadd.f32 0.0, %v102
  %104 = vdwg.mxu0
  %vm105 = vcmask 261120
  %v107 = vsel %vm105, %v82, 0
  %v110 = vsel %vm105, %v85, 0
  %v113 = vsel %vm105, %v88, 0
  %v116 = vsel %vm105, %v91, 0
  %v119 = vsel %vm105, %v94, 0
  %v122 = vsel %vm105, %v97, 0
  %v125 = vsel %vm105, %v100, 0
  %v128 = vsel %vm105, %v103, 0
  %130 = vmatpush.msra.mxu0 0.0
  %131 = vmatpush.msra.mxu0 0.0
  %132 = vmatpush.msra.mxu0 0.0
  %133 = vmatpush.msra.mxu0 0.0
  %134 = vmatpush.msra.mxu0 0.0
  %135 = vmatpush.msra.mxu0 0.0
  %136 = vmatpush.msra.mxu0 0.0
  %137 = vmatpush.msra.mxu0 0.0
  %138 = vmatpush.msra.mxu0 0.0
  %139 = vmatpush.msra.mxu0 0.0
  %140 = vmatpush.msra.mxu0 0.0
  %141 = vmatpush.msra.mxu0 0.0
  %142 = vmatpush.msra.mxu0 %v30
  %143 = vmatpush.msra.mxu0 %v29
  %144 = vmatpush.msra.mxu0 %v28
  %145 = vmatpush.msra.mxu0 %v27
  %146 = vmatmul.f32.gmra.mxu0 %v107
  %v147 = vpop.f32.mrf.mxu0
  %v148 = vadd.f32 0.0, %v147
  %149 = vmatmul.f32.gmra.mxu0 %v110
  %v150 = vpop.f32.mrf.mxu0
  %v151 = vadd.f32 0.0, %v150
  %152 = vmatmul.f32.gmra.mxu0 %v113
  %v153 = vpop.f32.mrf.mxu0
  %v154 = vadd.f32 0.0, %v153
  %155 = vmatmul.f32.gmra.mxu0 %v116
  %v156 = vpop.f32.mrf.mxu0
  %v157 = vadd.f32 0.0, %v156
  %158 = vmatmul.f32.gmra.mxu0 %v119
  %v159 = vpop.f32.mrf.mxu0
  %v160 = vadd.f32 0.0, %v159
  %161 = vmatmul.f32.gmra.mxu0 %v122
  %v162 = vpop.f32.mrf.mxu0
  %v163 = vadd.f32 0.0, %v162
  %164 = vmatmul.f32.gmra.mxu0 %v125
  %v165 = vpop.f32.mrf.mxu0
  %v166 = vadd.f32 0.0, %v165
  %167 = vmatmul.f32.gmra.mxu0 %v128
  %v168 = vpop.f32.mrf.mxu0
  %v169 = vadd.f32 0.0, %v168
  %170 = vdwg.mxu0
  %171 = vxpose.xlu0.b32.start [1/16] %v148, 128
  %172 = vxpose.xlu0.b32.cont [2/16] %v151, 128
  %173 = vxpose.xlu0.b32.cont [3/16] %v154, 128
  %174 = vxpose.xlu0.b32.cont [4/16] %v157, 128
  %175 = vxpose.xlu0.b32.cont [5/16] %v160, 128
  %176 = vxpose.xlu0.b32.cont [6/16] %v163, 128
  %177 = vxpose.xlu0.b32.cont [7/16] %v166, 128
  %178 = vxpose.xlu0.b32.cont [8/16] %v169, 128
  %179 = vxpose.xlu0.b32.cont [9/16] 0.0, 128
  %180 = vxpose.xlu0.b32.cont [10/16] 0.0, 128
  %181 = vxpose.xlu0.b32.cont [11/16] 0.0, 128
  %182 = vxpose.xlu0.b32.cont [12/16] 0.0, 128
  %183 = vxpose.xlu0.b32.cont [13/16] 0.0, 128
  %184 = vxpose.xlu0.b32.cont [14/16] 0.0, 128
  %185 = vxpose.xlu0.b32.cont [15/16] 0.0, 128
  %186 = vxpose.xlu0.b32.end [16/16] 0.0, 128
  %v187 = vpop.trf.xlu0
  %v188 = vpop.trf.xlu0
  %v189 = vpop.trf.xlu0
  %v190 = vpop.trf.xlu0
  %v191 = vpop.trf.xlu0
  %v192 = vpop.trf.xlu0
  %v193 = vpop.trf.xlu0
  %v194 = vpop.trf.xlu0
  %v195 = vpop.trf.xlu0
  %v196 = vpop.trf.xlu0
  %v197 = vpop.trf.xlu0
  %v198 = vpop.trf.xlu0
  %v199 = vpop.trf.xlu0
  %v200 = vpop.trf.xlu0
  %v201 = vpop.trf.xlu0
  %v202 = vpop.trf.xlu0
  %vm203 = vcmp.gt.f32.partialorder %v31, 0.0
  %vm204 = vcmp.gt.f32.partialorder %v32, 0.0
  %vm205 = vcmp.gt.f32.partialorder %v33, 0.0
  %vm206 = vcmp.gt.f32.partialorder %v34, 0.0
  %vm207 = vcmp.gt.f32.partialorder %v35, 0.0
  %vm208 = vcmp.gt.f32.partialorder %v36, 0.0
  %vm209 = vcmp.gt.f32.partialorder %v37, 0.0
  %vm210 = vcmp.gt.f32.partialorder %v38, 0.0
  %212 = vset.pattern.permute.xlu0 4
  %213 = vperm.xlu0 %212, %v148
  %v214 = vpop.permute.xlu0 %213
  %217 = vset.pattern.permute.xlu0 4
  %218 = vperm.xlu0 %217, %v151
  %v219 = vpop.permute.xlu0 %218
  %222 = vset.pattern.permute.xlu0 4
  %223 = vperm.xlu0 %222, %v154
  %v224 = vpop.permute.xlu0 %223
  %227 = vset.pattern.permute.xlu0 4
  %228 = vperm.xlu0 %227, %v157
  %v229 = vpop.permute.xlu0 %228
  %232 = vset.pattern.permute.xlu0 4
  %233 = vperm.xlu0 %232, %v160
  %v234 = vpop.permute.xlu0 %233
  %237 = vset.pattern.permute.xlu0 4
  %238 = vperm.xlu0 %237, %v163
  %v239 = vpop.permute.xlu0 %238
  %242 = vset.pattern.permute.xlu0 4
  %243 = vperm.xlu0 %242, %v166
  %v244 = vpop.permute.xlu0 %243
  %247 = vset.pattern.permute.xlu0 4
  %248 = vperm.xlu0 %247, %v169
  %v249 = vpop.permute.xlu0 %248
  %v251 = vperm.slane %v187, 0
  %v252 = vadd.f32 %v214, %v251
  %v253 = vadd.f32 %v219, %v251
  %v254 = vadd.f32 %v224, %v251
  %v255 = vadd.f32 %v229, %v251
  %v256 = vadd.f32 %v234, %v251
  %v257 = vadd.f32 %v239, %v251
  %v258 = vadd.f32 %v244, %v251
  %v259 = vadd.f32 %v249, %v251
  %vm260 = vcmp.gt.f32.partialorder %v252, 0.0
  %vm261 = vcmp.gt.f32.partialorder %v253, 0.0
  %vm262 = vcmp.gt.f32.partialorder %v254, 0.0
  %vm263 = vcmp.gt.f32.partialorder %v255, 0.0
  %vm264 = vcmp.gt.f32.partialorder %v256, 0.0
  %vm265 = vcmp.gt.f32.partialorder %v257, 0.0
  %vm266 = vcmp.gt.f32.partialorder %v258, 0.0
  %vm267 = vcmp.gt.f32.partialorder %v259, 0.0
  %v268 = vmul.f32 %v252, 0.01
  %v269 = vmul.f32 %v253, 0.01
  %v270 = vmul.f32 %v254, 0.01
  %v271 = vmul.f32 %v255, 0.01
  %v272 = vmul.f32 %v256, 0.01
  %v273 = vmul.f32 %v257, 0.01
  %v274 = vmul.f32 %v258, 0.01
  %v275 = vmul.f32 %v259, 0.01
  %v276 = vsel %vm260, %v252, %v268
  %v277 = vsel %vm261, %v253, %v269
  %v278 = vsel %vm262, %v254, %v270
  %v279 = vsel %vm263, %v255, %v271
  %v280 = vsel %vm264, %v256, %v272
  %v281 = vsel %vm265, %v257, %v273
  %v282 = vsel %vm266, %v258, %v274
  %v283 = vsel %vm267, %v259, %v275
  %v284 = vsel %vm203, %v276, -1e+30
  %v285 = vsel %vm204, %v277, -1e+30
  %v286 = vsel %vm205, %v278, -1e+30
  %v287 = vsel %vm206, %v279, -1e+30
  %v288 = vsel %vm207, %v280, -1e+30
  %v289 = vsel %vm208, %v281, -1e+30
  %v290 = vsel %vm209, %v282, -1e+30
  %v291 = vsel %vm210, %v283, -1e+30
  %vm292 = vcmask 523264
  %v293 = vsel %vm292, %v284, -inf
  %294 = vmax.xlane.f32.xlu0 %v293
  %v295 = vpop.xlane.xlu0 %294
  %v296 = vsel %vm292, %v285, -inf
  %297 = vmax.xlane.f32.xlu0 %v296
  %v298 = vpop.xlane.xlu0 %297
  %v299 = vsel %vm292, %v286, -inf
  %300 = vmax.xlane.f32.xlu0 %v299
  %v301 = vpop.xlane.xlu0 %300
  %v302 = vsel %vm292, %v287, -inf
  %303 = vmax.xlane.f32.xlu0 %v302
  %v304 = vpop.xlane.xlu0 %303
  %v305 = vsel %vm292, %v288, -inf
  %306 = vmax.xlane.f32.xlu0 %v305
  %v307 = vpop.xlane.xlu0 %306
  %v308 = vsel %vm292, %v289, -inf
  %309 = vmax.xlane.f32.xlu0 %v308
  %v310 = vpop.xlane.xlu0 %309
  %v311 = vsel %vm292, %v290, -inf
  %312 = vmax.xlane.f32.xlu0 %v311
  %v313 = vpop.xlane.xlu0 %312
  %v314 = vsel %vm292, %v291, -inf
  %315 = vmax.xlane.f32.xlu0 %v314
  %v316 = vpop.xlane.xlu0 %315
  %v317 = vsub.f32 %v284, %v295
  %v318 = vsub.f32 %v285, %v298
  %v319 = vsub.f32 %v286, %v301
  %v320 = vsub.f32 %v287, %v304
  %v321 = vsub.f32 %v288, %v307
  %v322 = vsub.f32 %v289, %v310
  %v323 = vsub.f32 %v290, %v313
  %v324 = vsub.f32 %v291, %v316
  %v325 = vmul.f32 %v317, 1.442695
  %v326 = vpow.pop %v325
  %v327 = vmul.f32 %v318, 1.442695
  %v328 = vpow.pop %v327
  %v329 = vmul.f32 %v319, 1.442695
  %v330 = vpow.pop %v329
  %v331 = vmul.f32 %v320, 1.442695
  %v332 = vpow.pop %v331
  %v333 = vmul.f32 %v321, 1.442695
  %v334 = vpow.pop %v333
  %v335 = vmul.f32 %v322, 1.442695
  %v336 = vpow.pop %v335
  %v337 = vmul.f32 %v323, 1.442695
  %v338 = vpow.pop %v337
  %v339 = vmul.f32 %v324, 1.442695
  %v340 = vpow.pop %v339
  %v341 = vsel %vm292, %v326, 0.0
  %342 = vadd.xlane.f32.xlu0 %v341
  %v343 = vpop.xlane.xlu0 %342
  %v344 = vsel %vm292, %v328, 0.0
  %345 = vadd.xlane.f32.xlu0 %v344
  %v346 = vpop.xlane.xlu0 %345
  %v347 = vsel %vm292, %v330, 0.0
  %348 = vadd.xlane.f32.xlu0 %v347
  %v349 = vpop.xlane.xlu0 %348
  %v350 = vsel %vm292, %v332, 0.0
  %351 = vadd.xlane.f32.xlu0 %v350
  %v352 = vpop.xlane.xlu0 %351
  %v353 = vsel %vm292, %v334, 0.0
  %354 = vadd.xlane.f32.xlu0 %v353
  %v355 = vpop.xlane.xlu0 %354
  %v356 = vsel %vm292, %v336, 0.0
  %357 = vadd.xlane.f32.xlu0 %v356
  %v358 = vpop.xlane.xlu0 %357
  %v359 = vsel %vm292, %v338, 0.0
  %360 = vadd.xlane.f32.xlu0 %v359
  %v361 = vpop.xlane.xlu0 %360
  %v362 = vsel %vm292, %v340, 0.0
  %363 = vadd.xlane.f32.xlu0 %v362
  %v364 = vpop.xlane.xlu0 %363
  %v365 = vmax.f32 %v343, 1e-30
  %v366 = vmax.f32 %v346, 1e-30
  %v367 = vmax.f32 %v349, 1e-30
  %v368 = vmax.f32 %v352, 1e-30
  %v369 = vmax.f32 %v355, 1e-30
  %v370 = vmax.f32 %v358, 1e-30
  %v371 = vmax.f32 %v361, 1e-30
  %v372 = vmax.f32 %v364, 1e-30
  %v373 = vrcp.pop %v365
  %v374 = vmul.f32 %v365, %v373
  %v375 = vsub.f32 1.0, %v374
  %v376 = vmul.f32 %v373, %v375
  %v377 = vadd.f32 %v373, %v376
  %vm378 = vweird.f32 %v365
  %vm379 = vweird.f32 %v373
  %vm380 = vmor %vm378, %vm379
  %v381 = vsel %vm380, %v373, %v377
  %v382 = vand.u32 2147483647, %v365
  %vm383 = vcmp.eq.f32.partialorder %v382, 8.507059e+37
  %v384 = vand.u32 %v365, 2147483648
  %v385 = vor.u32 1.1754944e-38, %v384
  %v386 = vsel %vm383, %v385, %v381
  %v387 = vrcp.pop %v366
  %v388 = vmul.f32 %v366, %v387
  %v389 = vsub.f32 1.0, %v388
  %v390 = vmul.f32 %v387, %v389
  %v391 = vadd.f32 %v387, %v390
  %vm392 = vweird.f32 %v366
  %vm393 = vweird.f32 %v387
  %vm394 = vmor %vm392, %vm393
  %v395 = vsel %vm394, %v387, %v391
  %v396 = vand.u32 2147483647, %v366
  %vm397 = vcmp.eq.f32.partialorder %v396, 8.507059e+37
  %v398 = vand.u32 %v366, 2147483648
  %v399 = vor.u32 1.1754944e-38, %v398
  %v400 = vsel %vm397, %v399, %v395
  %v401 = vrcp.pop %v367
  %v402 = vmul.f32 %v367, %v401
  %v403 = vsub.f32 1.0, %v402
  %v404 = vmul.f32 %v401, %v403
  %v405 = vadd.f32 %v401, %v404
  %vm406 = vweird.f32 %v367
  %vm407 = vweird.f32 %v401
  %vm408 = vmor %vm406, %vm407
  %v409 = vsel %vm408, %v401, %v405
  %v410 = vand.u32 2147483647, %v367
  %vm411 = vcmp.eq.f32.partialorder %v410, 8.507059e+37
  %v412 = vand.u32 %v367, 2147483648
  %v413 = vor.u32 1.1754944e-38, %v412
  %v414 = vsel %vm411, %v413, %v409
  %v415 = vrcp.pop %v368
  %v416 = vmul.f32 %v368, %v415
  %v417 = vsub.f32 1.0, %v416
  %v418 = vmul.f32 %v415, %v417
  %v419 = vadd.f32 %v415, %v418
  %vm420 = vweird.f32 %v368
  %vm421 = vweird.f32 %v415
  %vm422 = vmor %vm420, %vm421
  %v423 = vsel %vm422, %v415, %v419
  %v424 = vand.u32 2147483647, %v368
  %vm425 = vcmp.eq.f32.partialorder %v424, 8.507059e+37
  %v426 = vand.u32 %v368, 2147483648
  %v427 = vor.u32 1.1754944e-38, %v426
  %v428 = vsel %vm425, %v427, %v423
  %v429 = vrcp.pop %v369
  %v430 = vmul.f32 %v369, %v429
  %v431 = vsub.f32 1.0, %v430
  %v432 = vmul.f32 %v429, %v431
  %v433 = vadd.f32 %v429, %v432
  %vm434 = vweird.f32 %v369
  %vm435 = vweird.f32 %v429
  %vm436 = vmor %vm434, %vm435
  %v437 = vsel %vm436, %v429, %v433
  %v438 = vand.u32 2147483647, %v369
  %vm439 = vcmp.eq.f32.partialorder %v438, 8.507059e+37
  %v440 = vand.u32 %v369, 2147483648
  %v441 = vor.u32 1.1754944e-38, %v440
  %v442 = vsel %vm439, %v441, %v437
  %v443 = vrcp.pop %v370
  %v444 = vmul.f32 %v370, %v443
  %v445 = vsub.f32 1.0, %v444
  %v446 = vmul.f32 %v443, %v445
  %v447 = vadd.f32 %v443, %v446
  %vm448 = vweird.f32 %v370
  %vm449 = vweird.f32 %v443
  %vm450 = vmor %vm448, %vm449
  %v451 = vsel %vm450, %v443, %v447
  %v452 = vand.u32 2147483647, %v370
  %vm453 = vcmp.eq.f32.partialorder %v452, 8.507059e+37
  %v454 = vand.u32 %v370, 2147483648
  %v455 = vor.u32 1.1754944e-38, %v454
  %v456 = vsel %vm453, %v455, %v451
  %v457 = vrcp.pop %v371
  %v458 = vmul.f32 %v371, %v457
  %v459 = vsub.f32 1.0, %v458
  %v460 = vmul.f32 %v457, %v459
  %v461 = vadd.f32 %v457, %v460
  %vm462 = vweird.f32 %v371
  %vm463 = vweird.f32 %v457
  %vm464 = vmor %vm462, %vm463
  %v465 = vsel %vm464, %v457, %v461
  %v466 = vand.u32 2147483647, %v371
  %vm467 = vcmp.eq.f32.partialorder %v466, 8.507059e+37
  %v468 = vand.u32 %v371, 2147483648
  %v469 = vor.u32 1.1754944e-38, %v468
  %v470 = vsel %vm467, %v469, %v465
  %v471 = vrcp.pop %v372
  %v472 = vmul.f32 %v372, %v471
  %v473 = vsub.f32 1.0, %v472
  %v474 = vmul.f32 %v471, %v473
  %v475 = vadd.f32 %v471, %v474
  %vm476 = vweird.f32 %v372
  %vm477 = vweird.f32 %v471
  %vm478 = vmor %vm476, %vm477
  %v479 = vsel %vm478, %v471, %v475
  %v480 = vand.u32 2147483647, %v372
  %vm481 = vcmp.eq.f32.partialorder %v480, 8.507059e+37
  %v482 = vand.u32 %v372, 2147483648
  %v483 = vor.u32 1.1754944e-38, %v482
  %v484 = vsel %vm481, %v483, %v479
  %v485 = vmul.f32 %v326, %v386
  %v486 = vmul.f32 %v328, %v400
  %v487 = vmul.f32 %v330, %v414
  %v488 = vmul.f32 %v332, %v428
  %v489 = vmul.f32 %v334, %v442
  %v490 = vmul.f32 %v336, %v456
  %v491 = vmul.f32 %v338, %v470
  %v492 = vmul.f32 %v340, %v484
  %v494 = vsel %vm292, %v485, 0
  %v497 = vsel %vm292, %v486, 0
  %v500 = vsel %vm292, %v487, 0
  %v503 = vsel %vm292, %v488, 0
  %v506 = vsel %vm292, %v489, 0
  %v509 = vsel %vm292, %v490, 0
  %v512 = vsel %vm292, %v491, 0
  %v515 = vsel %vm292, %v492, 0
  %517 = vmatpush.msra.mxu0 0.0
  %518 = vmatpush.msra.mxu0 0.0
  %519 = vmatpush.msra.mxu0 0.0
  %520 = vmatpush.msra.mxu0 0.0
  %521 = vmatpush.msra.mxu0 0.0
  %522 = vmatpush.msra.mxu0 0.0
  %523 = vmatpush.msra.mxu0 0.0
  %524 = vmatpush.msra.mxu0 0.0
  %525 = vmatpush.msra.mxu0 %v103
  %526 = vmatpush.msra.mxu0 %v100
  %527 = vmatpush.msra.mxu0 %v97
  %528 = vmatpush.msra.mxu0 %v94
  %529 = vmatpush.msra.mxu0 %v91
  %530 = vmatpush.msra.mxu0 %v88
  %531 = vmatpush.msra.mxu0 %v85
  %532 = vmatpush.msra.mxu0 %v82
  %533 = vmatmul.f32.gmra.mxu0 %v494
  %v534 = vpop.f32.mrf.mxu0
  %v535 = vadd.f32 0.0, %v534
  %536 = vmatmul.f32.gmra.mxu0 %v497
  %v537 = vpop.f32.mrf.mxu0
  %v538 = vadd.f32 0.0, %v537
  %539 = vmatmul.f32.gmra.mxu0 %v500
  %v540 = vpop.f32.mrf.mxu0
  %v541 = vadd.f32 0.0, %v540
  %542 = vmatmul.f32.gmra.mxu0 %v503
  %v543 = vpop.f32.mrf.mxu0
  %v544 = vadd.f32 0.0, %v543
  %545 = vmatmul.f32.gmra.mxu0 %v506
  %v546 = vpop.f32.mrf.mxu0
  %v547 = vadd.f32 0.0, %v546
  %548 = vmatmul.f32.gmra.mxu0 %v509
  %v549 = vpop.f32.mrf.mxu0
  %v550 = vadd.f32 0.0, %v549
  %551 = vmatmul.f32.gmra.mxu0 %v512
  %v552 = vpop.f32.mrf.mxu0
  %v553 = vadd.f32 0.0, %v552
  %554 = vmatmul.f32.gmra.mxu0 %v515
  %v555 = vpop.f32.mrf.mxu0
  %v556 = vadd.f32 0.0, %v555
  %557 = vdwg.mxu0
  %558 = vset.pattern.permute.xlu0 5
  %559 = vperm.xlu0 %558, %v148
  %v560 = vpop.permute.xlu0 %559
  %562 = vset.pattern.permute.xlu0 5
  %563 = vperm.xlu0 %562, %v151
  %v564 = vpop.permute.xlu0 %563
  %566 = vset.pattern.permute.xlu0 5
  %567 = vperm.xlu0 %566, %v154
  %v568 = vpop.permute.xlu0 %567
  %570 = vset.pattern.permute.xlu0 5
  %571 = vperm.xlu0 %570, %v157
  %v572 = vpop.permute.xlu0 %571
  %574 = vset.pattern.permute.xlu0 5
  %575 = vperm.xlu0 %574, %v160
  %v576 = vpop.permute.xlu0 %575
  %578 = vset.pattern.permute.xlu0 5
  %579 = vperm.xlu0 %578, %v163
  %v580 = vpop.permute.xlu0 %579
  %582 = vset.pattern.permute.xlu0 5
  %583 = vperm.xlu0 %582, %v166
  %v584 = vpop.permute.xlu0 %583
  %586 = vset.pattern.permute.xlu0 5
  %587 = vperm.xlu0 %586, %v169
  %v588 = vpop.permute.xlu0 %587
  %v590 = vperm.slane %v187, 1
  %v591 = vadd.f32 %v560, %v590
  %v592 = vadd.f32 %v564, %v590
  %v593 = vadd.f32 %v568, %v590
  %v594 = vadd.f32 %v572, %v590
  %v595 = vadd.f32 %v576, %v590
  %v596 = vadd.f32 %v580, %v590
  %v597 = vadd.f32 %v584, %v590
  %v598 = vadd.f32 %v588, %v590
  %vm599 = vcmp.gt.f32.partialorder %v591, 0.0
  %vm600 = vcmp.gt.f32.partialorder %v592, 0.0
  %vm601 = vcmp.gt.f32.partialorder %v593, 0.0
  %vm602 = vcmp.gt.f32.partialorder %v594, 0.0
  %vm603 = vcmp.gt.f32.partialorder %v595, 0.0
  %vm604 = vcmp.gt.f32.partialorder %v596, 0.0
  %vm605 = vcmp.gt.f32.partialorder %v597, 0.0
  %vm606 = vcmp.gt.f32.partialorder %v598, 0.0
  %v607 = vmul.f32 %v591, 0.01
  %v608 = vmul.f32 %v592, 0.01
  %v609 = vmul.f32 %v593, 0.01
  %v610 = vmul.f32 %v594, 0.01
  %v611 = vmul.f32 %v595, 0.01
  %v612 = vmul.f32 %v596, 0.01
  %v613 = vmul.f32 %v597, 0.01
  %v614 = vmul.f32 %v598, 0.01
  %v615 = vsel %vm599, %v591, %v607
  %v616 = vsel %vm600, %v592, %v608
  %v617 = vsel %vm601, %v593, %v609
  %v618 = vsel %vm602, %v594, %v610
  %v619 = vsel %vm603, %v595, %v611
  %v620 = vsel %vm604, %v596, %v612
  %v621 = vsel %vm605, %v597, %v613
  %v622 = vsel %vm606, %v598, %v614
  %v623 = vsel %vm203, %v615, -1e+30
  %v624 = vsel %vm204, %v616, -1e+30
  %v625 = vsel %vm205, %v617, -1e+30
  %v626 = vsel %vm206, %v618, -1e+30
  %v627 = vsel %vm207, %v619, -1e+30
  %v628 = vsel %vm208, %v620, -1e+30
  %v629 = vsel %vm209, %v621, -1e+30
  %v630 = vsel %vm210, %v622, -1e+30
  %v631 = vsel %vm292, %v623, -inf
  %632 = vmax.xlane.f32.xlu0 %v631
  %v633 = vpop.xlane.xlu0 %632
  %v634 = vsel %vm292, %v624, -inf
  %635 = vmax.xlane.f32.xlu0 %v634
  %v636 = vpop.xlane.xlu0 %635
  %v637 = vsel %vm292, %v625, -inf
  %638 = vmax.xlane.f32.xlu0 %v637
  %v639 = vpop.xlane.xlu0 %638
  %v640 = vsel %vm292, %v626, -inf
  %641 = vmax.xlane.f32.xlu0 %v640
  %v642 = vpop.xlane.xlu0 %641
  %v643 = vsel %vm292, %v627, -inf
  %644 = vmax.xlane.f32.xlu0 %v643
  %v645 = vpop.xlane.xlu0 %644
  %v646 = vsel %vm292, %v628, -inf
  %647 = vmax.xlane.f32.xlu0 %v646
  %v648 = vpop.xlane.xlu0 %647
  %v649 = vsel %vm292, %v629, -inf
  %650 = vmax.xlane.f32.xlu0 %v649
  %v651 = vpop.xlane.xlu0 %650
  %v652 = vsel %vm292, %v630, -inf
  %653 = vmax.xlane.f32.xlu0 %v652
  %v654 = vpop.xlane.xlu0 %653
  %v655 = vsub.f32 %v623, %v633
  %v656 = vsub.f32 %v624, %v636
  %v657 = vsub.f32 %v625, %v639
  %v658 = vsub.f32 %v626, %v642
  %v659 = vsub.f32 %v627, %v645
  %v660 = vsub.f32 %v628, %v648
  %v661 = vsub.f32 %v629, %v651
  %v662 = vsub.f32 %v630, %v654
  %v663 = vmul.f32 %v655, 1.442695
  %v664 = vpow.pop %v663
  %v665 = vmul.f32 %v656, 1.442695
  %v666 = vpow.pop %v665
  %v667 = vmul.f32 %v657, 1.442695
  %v668 = vpow.pop %v667
  %v669 = vmul.f32 %v658, 1.442695
  %v670 = vpow.pop %v669
  %v671 = vmul.f32 %v659, 1.442695
  %v672 = vpow.pop %v671
  %v673 = vmul.f32 %v660, 1.442695
  %v674 = vpow.pop %v673
  %v675 = vmul.f32 %v661, 1.442695
  %v676 = vpow.pop %v675
  %v677 = vmul.f32 %v662, 1.442695
  %v678 = vpow.pop %v677
  %v679 = vsel %vm292, %v664, 0.0
  %680 = vadd.xlane.f32.xlu0 %v679
  %v681 = vpop.xlane.xlu0 %680
  %v682 = vsel %vm292, %v666, 0.0
  %683 = vadd.xlane.f32.xlu0 %v682
  %v684 = vpop.xlane.xlu0 %683
  %v685 = vsel %vm292, %v668, 0.0
  %686 = vadd.xlane.f32.xlu0 %v685
  %v687 = vpop.xlane.xlu0 %686
  %v688 = vsel %vm292, %v670, 0.0
  %689 = vadd.xlane.f32.xlu0 %v688
  %v690 = vpop.xlane.xlu0 %689
  %v691 = vsel %vm292, %v672, 0.0
  %692 = vadd.xlane.f32.xlu0 %v691
  %v693 = vpop.xlane.xlu0 %692
  %v694 = vsel %vm292, %v674, 0.0
  %695 = vadd.xlane.f32.xlu0 %v694
  %v696 = vpop.xlane.xlu0 %695
  %v697 = vsel %vm292, %v676, 0.0
  %698 = vadd.xlane.f32.xlu0 %v697
  %v699 = vpop.xlane.xlu0 %698
  %v700 = vsel %vm292, %v678, 0.0
  %701 = vadd.xlane.f32.xlu0 %v700
  %v702 = vpop.xlane.xlu0 %701
  %v703 = vmax.f32 %v681, 1e-30
  %v704 = vmax.f32 %v684, 1e-30
  %v705 = vmax.f32 %v687, 1e-30
  %v706 = vmax.f32 %v690, 1e-30
  %v707 = vmax.f32 %v693, 1e-30
  %v708 = vmax.f32 %v696, 1e-30
  %v709 = vmax.f32 %v699, 1e-30
  %v710 = vmax.f32 %v702, 1e-30
  %v711 = vrcp.pop %v703
  %v712 = vmul.f32 %v703, %v711
  %v713 = vsub.f32 1.0, %v712
  %v714 = vmul.f32 %v711, %v713
  %v715 = vadd.f32 %v711, %v714
  %vm716 = vweird.f32 %v703
  %vm717 = vweird.f32 %v711
  %vm718 = vmor %vm716, %vm717
  %v719 = vsel %vm718, %v711, %v715
  %v720 = vand.u32 2147483647, %v703
  %vm721 = vcmp.eq.f32.partialorder %v720, 8.507059e+37
  %v722 = vand.u32 %v703, 2147483648
  %v723 = vor.u32 1.1754944e-38, %v722
  %v724 = vsel %vm721, %v723, %v719
  %v725 = vrcp.pop %v704
  %v726 = vmul.f32 %v704, %v725
  %v727 = vsub.f32 1.0, %v726
  %v728 = vmul.f32 %v725, %v727
  %v729 = vadd.f32 %v725, %v728
  %vm730 = vweird.f32 %v704
  %vm731 = vweird.f32 %v725
  %vm732 = vmor %vm730, %vm731
  %v733 = vsel %vm732, %v725, %v729
  %v734 = vand.u32 2147483647, %v704
  %vm735 = vcmp.eq.f32.partialorder %v734, 8.507059e+37
  %v736 = vand.u32 %v704, 2147483648
  %v737 = vor.u32 1.1754944e-38, %v736
  %v738 = vsel %vm735, %v737, %v733
  %v739 = vrcp.pop %v705
  %v740 = vmul.f32 %v705, %v739
  %v741 = vsub.f32 1.0, %v740
  %v742 = vmul.f32 %v739, %v741
  %v743 = vadd.f32 %v739, %v742
  %vm744 = vweird.f32 %v705
  %vm745 = vweird.f32 %v739
  %vm746 = vmor %vm744, %vm745
  %v747 = vsel %vm746, %v739, %v743
  %v748 = vand.u32 2147483647, %v705
  %vm749 = vcmp.eq.f32.partialorder %v748, 8.507059e+37
  %v750 = vand.u32 %v705, 2147483648
  %v751 = vor.u32 1.1754944e-38, %v750
  %v752 = vsel %vm749, %v751, %v747
  %v753 = vrcp.pop %v706
  %v754 = vmul.f32 %v706, %v753
  %v755 = vsub.f32 1.0, %v754
  %v756 = vmul.f32 %v753, %v755
  %v757 = vadd.f32 %v753, %v756
  %vm758 = vweird.f32 %v706
  %vm759 = vweird.f32 %v753
  %vm760 = vmor %vm758, %vm759
  %v761 = vsel %vm760, %v753, %v757
  %v762 = vand.u32 2147483647, %v706
  %vm763 = vcmp.eq.f32.partialorder %v762, 8.507059e+37
  %v764 = vand.u32 %v706, 2147483648
  %v765 = vor.u32 1.1754944e-38, %v764
  %v766 = vsel %vm763, %v765, %v761
  %v767 = vrcp.pop %v707
  %v768 = vmul.f32 %v707, %v767
  %v769 = vsub.f32 1.0, %v768
  %v770 = vmul.f32 %v767, %v769
  %v771 = vadd.f32 %v767, %v770
  %vm772 = vweird.f32 %v707
  %vm773 = vweird.f32 %v767
  %vm774 = vmor %vm772, %vm773
  %v775 = vsel %vm774, %v767, %v771
  %v776 = vand.u32 2147483647, %v707
  %vm777 = vcmp.eq.f32.partialorder %v776, 8.507059e+37
  %v778 = vand.u32 %v707, 2147483648
  %v779 = vor.u32 1.1754944e-38, %v778
  %v780 = vsel %vm777, %v779, %v775
  %v781 = vrcp.pop %v708
  %v782 = vmul.f32 %v708, %v781
  %v783 = vsub.f32 1.0, %v782
  %v784 = vmul.f32 %v781, %v783
  %v785 = vadd.f32 %v781, %v784
  %vm786 = vweird.f32 %v708
  %vm787 = vweird.f32 %v781
  %vm788 = vmor %vm786, %vm787
  %v789 = vsel %vm788, %v781, %v785
  %v790 = vand.u32 2147483647, %v708
  %vm791 = vcmp.eq.f32.partialorder %v790, 8.507059e+37
  %v792 = vand.u32 %v708, 2147483648
  %v793 = vor.u32 1.1754944e-38, %v792
  %v794 = vsel %vm791, %v793, %v789
  %v795 = vrcp.pop %v709
  %v796 = vmul.f32 %v709, %v795
  %v797 = vsub.f32 1.0, %v796
  %v798 = vmul.f32 %v795, %v797
  %v799 = vadd.f32 %v795, %v798
  %vm800 = vweird.f32 %v709
  %vm801 = vweird.f32 %v795
  %vm802 = vmor %vm800, %vm801
  %v803 = vsel %vm802, %v795, %v799
  %v804 = vand.u32 2147483647, %v709
  %vm805 = vcmp.eq.f32.partialorder %v804, 8.507059e+37
  %v806 = vand.u32 %v709, 2147483648
  %v807 = vor.u32 1.1754944e-38, %v806
  %v808 = vsel %vm805, %v807, %v803
  %v809 = vrcp.pop %v710
  %v810 = vmul.f32 %v710, %v809
  %v811 = vsub.f32 1.0, %v810
  %v812 = vmul.f32 %v809, %v811
  %v813 = vadd.f32 %v809, %v812
  %vm814 = vweird.f32 %v710
  %vm815 = vweird.f32 %v809
  %vm816 = vmor %vm814, %vm815
  %v817 = vsel %vm816, %v809, %v813
  %v818 = vand.u32 2147483647, %v710
  %vm819 = vcmp.eq.f32.partialorder %v818, 8.507059e+37
  %v820 = vand.u32 %v710, 2147483648
  %v821 = vor.u32 1.1754944e-38, %v820
  %v822 = vsel %vm819, %v821, %v817
  %v823 = vmul.f32 %v664, %v724
  %v824 = vmul.f32 %v666, %v738
  %v825 = vmul.f32 %v668, %v752
  %v826 = vmul.f32 %v670, %v766
  %v827 = vmul.f32 %v672, %v780
  %v828 = vmul.f32 %v674, %v794
  %v829 = vmul.f32 %v676, %v808
  %v830 = vmul.f32 %v678, %v822
  %831 = vrot.lane.b32.xlu0 %v82, 120
  %v832 = vpop.permute.xlu0 %831
  %833 = vrot.lane.b32.xlu0 %v85, 120
  %v834 = vpop.permute.xlu0 %833
  %835 = vrot.lane.b32.xlu0 %v88, 120
  %v836 = vpop.permute.xlu0 %835
  %837 = vrot.lane.b32.xlu0 %v91, 120
  %v838 = vpop.permute.xlu0 %837
  %839 = vrot.lane.b32.xlu0 %v94, 120
  %v840 = vpop.permute.xlu0 %839
  %841 = vrot.lane.b32.xlu0 %v97, 120
  %v842 = vpop.permute.xlu0 %841
  %843 = vrot.lane.b32.xlu0 %v100, 120
  %v844 = vpop.permute.xlu0 %843
  %845 = vrot.lane.b32.xlu0 %v103, 120
  %v846 = vpop.permute.xlu0 %845
  %v856 = vsel %vm292, %v823, 0
  %v859 = vsel %vm292, %v824, 0
  %v862 = vsel %vm292, %v825, 0
  %v865 = vsel %vm292, %v826, 0
  %v868 = vsel %vm292, %v827, 0
  %v871 = vsel %vm292, %v828, 0
  %v874 = vsel %vm292, %v829, 0
  %v877 = vsel %vm292, %v830, 0
  %879 = vmatpush.msra.mxu0 0.0
  %880 = vmatpush.msra.mxu0 0.0
  %881 = vmatpush.msra.mxu0 0.0
  %882 = vmatpush.msra.mxu0 0.0
  %883 = vmatpush.msra.mxu0 0.0
  %884 = vmatpush.msra.mxu0 0.0
  %885 = vmatpush.msra.mxu0 0.0
  %886 = vmatpush.msra.mxu0 0.0
  %887 = vmatpush.msra.mxu0 %v846
  %888 = vmatpush.msra.mxu0 %v844
  %889 = vmatpush.msra.mxu0 %v842
  %890 = vmatpush.msra.mxu0 %v840
  %891 = vmatpush.msra.mxu0 %v838
  %892 = vmatpush.msra.mxu0 %v836
  %893 = vmatpush.msra.mxu0 %v834
  %894 = vmatpush.msra.mxu0 %v832
  %895 = vmatmul.f32.gmra.mxu0 %v856
  %v896 = vpop.f32.mrf.mxu0
  %v897 = vadd.f32 0.0, %v896
  %898 = vmatmul.f32.gmra.mxu0 %v859
  %v899 = vpop.f32.mrf.mxu0
  %v900 = vadd.f32 0.0, %v899
  %901 = vmatmul.f32.gmra.mxu0 %v862
  %v902 = vpop.f32.mrf.mxu0
  %v903 = vadd.f32 0.0, %v902
  %904 = vmatmul.f32.gmra.mxu0 %v865
  %v905 = vpop.f32.mrf.mxu0
  %v906 = vadd.f32 0.0, %v905
  %907 = vmatmul.f32.gmra.mxu0 %v868
  %v908 = vpop.f32.mrf.mxu0
  %v909 = vadd.f32 0.0, %v908
  %910 = vmatmul.f32.gmra.mxu0 %v871
  %v911 = vpop.f32.mrf.mxu0
  %v912 = vadd.f32 0.0, %v911
  %913 = vmatmul.f32.gmra.mxu0 %v874
  %v914 = vpop.f32.mrf.mxu0
  %v915 = vadd.f32 0.0, %v914
  %916 = vmatmul.f32.gmra.mxu0 %v877
  %v917 = vpop.f32.mrf.mxu0
  %v918 = vadd.f32 0.0, %v917
  %919 = vdwg.mxu0
  %920 = vset.pattern.permute.xlu0 6
  %921 = vperm.xlu0 %920, %v148
  %v922 = vpop.permute.xlu0 %921
  %924 = vset.pattern.permute.xlu0 6
  %925 = vperm.xlu0 %924, %v151
  %v926 = vpop.permute.xlu0 %925
  %928 = vset.pattern.permute.xlu0 6
  %929 = vperm.xlu0 %928, %v154
  %v930 = vpop.permute.xlu0 %929
  %932 = vset.pattern.permute.xlu0 6
  %933 = vperm.xlu0 %932, %v157
  %v934 = vpop.permute.xlu0 %933
  %936 = vset.pattern.permute.xlu0 6
  %937 = vperm.xlu0 %936, %v160
  %v938 = vpop.permute.xlu0 %937
  %940 = vset.pattern.permute.xlu0 6
  %941 = vperm.xlu0 %940, %v163
  %v942 = vpop.permute.xlu0 %941
  %944 = vset.pattern.permute.xlu0 6
  %945 = vperm.xlu0 %944, %v166
  %v946 = vpop.permute.xlu0 %945
  %948 = vset.pattern.permute.xlu0 6
  %949 = vperm.xlu0 %948, %v169
  %v950 = vpop.permute.xlu0 %949
  %v952 = vperm.slane %v187, 2
  %v953 = vadd.f32 %v922, %v952
  %v954 = vadd.f32 %v926, %v952
  %v955 = vadd.f32 %v930, %v952
  %v956 = vadd.f32 %v934, %v952
  %v957 = vadd.f32 %v938, %v952
  %v958 = vadd.f32 %v942, %v952
  %v959 = vadd.f32 %v946, %v952
  %v960 = vadd.f32 %v950, %v952
  %vm961 = vcmp.gt.f32.partialorder %v953, 0.0
  %vm962 = vcmp.gt.f32.partialorder %v954, 0.0
  %vm963 = vcmp.gt.f32.partialorder %v955, 0.0
  %vm964 = vcmp.gt.f32.partialorder %v956, 0.0
  %vm965 = vcmp.gt.f32.partialorder %v957, 0.0
  %vm966 = vcmp.gt.f32.partialorder %v958, 0.0
  %vm967 = vcmp.gt.f32.partialorder %v959, 0.0
  %vm968 = vcmp.gt.f32.partialorder %v960, 0.0
  %v969 = vmul.f32 %v953, 0.01
  %v970 = vmul.f32 %v954, 0.01
  %v971 = vmul.f32 %v955, 0.01
  %v972 = vmul.f32 %v956, 0.01
  %v973 = vmul.f32 %v957, 0.01
  %v974 = vmul.f32 %v958, 0.01
  %v975 = vmul.f32 %v959, 0.01
  %v976 = vmul.f32 %v960, 0.01
  %v977 = vsel %vm961, %v953, %v969
  %v978 = vsel %vm962, %v954, %v970
  %v979 = vsel %vm963, %v955, %v971
  %v980 = vsel %vm964, %v956, %v972
  %v981 = vsel %vm965, %v957, %v973
  %v982 = vsel %vm966, %v958, %v974
  %v983 = vsel %vm967, %v959, %v975
  %v984 = vsel %vm968, %v960, %v976
  %v985 = vsel %vm203, %v977, -1e+30
  %v986 = vsel %vm204, %v978, -1e+30
  %v987 = vsel %vm205, %v979, -1e+30
  %v988 = vsel %vm206, %v980, -1e+30
  %v989 = vsel %vm207, %v981, -1e+30
  %v990 = vsel %vm208, %v982, -1e+30
  %v991 = vsel %vm209, %v983, -1e+30
  %v992 = vsel %vm210, %v984, -1e+30
  %v993 = vsel %vm292, %v985, -inf
  %994 = vmax.xlane.f32.xlu0 %v993
  %v995 = vpop.xlane.xlu0 %994
  %v996 = vsel %vm292, %v986, -inf
  %997 = vmax.xlane.f32.xlu0 %v996
  %v998 = vpop.xlane.xlu0 %997
  %v999 = vsel %vm292, %v987, -inf
  %1000 = vmax.xlane.f32.xlu0 %v999
  %v1001 = vpop.xlane.xlu0 %1000
  %v1002 = vsel %vm292, %v988, -inf
  %1003 = vmax.xlane.f32.xlu0 %v1002
  %v1004 = vpop.xlane.xlu0 %1003
  %v1005 = vsel %vm292, %v989, -inf
  %1006 = vmax.xlane.f32.xlu0 %v1005
  %v1007 = vpop.xlane.xlu0 %1006
  %v1008 = vsel %vm292, %v990, -inf
  %1009 = vmax.xlane.f32.xlu0 %v1008
  %v1010 = vpop.xlane.xlu0 %1009
  %v1011 = vsel %vm292, %v991, -inf
  %1012 = vmax.xlane.f32.xlu0 %v1011
  %v1013 = vpop.xlane.xlu0 %1012
  %v1014 = vsel %vm292, %v992, -inf
  %1015 = vmax.xlane.f32.xlu0 %v1014
  %v1016 = vpop.xlane.xlu0 %1015
  %v1017 = vsub.f32 %v985, %v995
  %v1018 = vsub.f32 %v986, %v998
  %v1019 = vsub.f32 %v987, %v1001
  %v1020 = vsub.f32 %v988, %v1004
  %v1021 = vsub.f32 %v989, %v1007
  %v1022 = vsub.f32 %v990, %v1010
  %v1023 = vsub.f32 %v991, %v1013
  %v1024 = vsub.f32 %v992, %v1016
  %v1025 = vmul.f32 %v1017, 1.442695
  %v1026 = vpow.pop %v1025
  %v1027 = vmul.f32 %v1018, 1.442695
  %v1028 = vpow.pop %v1027
  %v1029 = vmul.f32 %v1019, 1.442695
  %v1030 = vpow.pop %v1029
  %v1031 = vmul.f32 %v1020, 1.442695
  %v1032 = vpow.pop %v1031
  %v1033 = vmul.f32 %v1021, 1.442695
  %v1034 = vpow.pop %v1033
  %v1035 = vmul.f32 %v1022, 1.442695
  %v1036 = vpow.pop %v1035
  %v1037 = vmul.f32 %v1023, 1.442695
  %v1038 = vpow.pop %v1037
  %v1039 = vmul.f32 %v1024, 1.442695
  %v1040 = vpow.pop %v1039
  %v1041 = vsel %vm292, %v1026, 0.0
  %1042 = vadd.xlane.f32.xlu0 %v1041
  %v1043 = vpop.xlane.xlu0 %1042
  %v1044 = vsel %vm292, %v1028, 0.0
  %1045 = vadd.xlane.f32.xlu0 %v1044
  %v1046 = vpop.xlane.xlu0 %1045
  %v1047 = vsel %vm292, %v1030, 0.0
  %1048 = vadd.xlane.f32.xlu0 %v1047
  %v1049 = vpop.xlane.xlu0 %1048
  %v1050 = vsel %vm292, %v1032, 0.0
  %1051 = vadd.xlane.f32.xlu0 %v1050
  %v1052 = vpop.xlane.xlu0 %1051
  %v1053 = vsel %vm292, %v1034, 0.0
  %1054 = vadd.xlane.f32.xlu0 %v1053
  %v1055 = vpop.xlane.xlu0 %1054
  %v1056 = vsel %vm292, %v1036, 0.0
  %1057 = vadd.xlane.f32.xlu0 %v1056
  %v1058 = vpop.xlane.xlu0 %1057
  %v1059 = vsel %vm292, %v1038, 0.0
  %1060 = vadd.xlane.f32.xlu0 %v1059
  %v1061 = vpop.xlane.xlu0 %1060
  %v1062 = vsel %vm292, %v1040, 0.0
  %1063 = vadd.xlane.f32.xlu0 %v1062
  %v1064 = vpop.xlane.xlu0 %1063
  %v1065 = vmax.f32 %v1043, 1e-30
  %v1066 = vmax.f32 %v1046, 1e-30
  %v1067 = vmax.f32 %v1049, 1e-30
  %v1068 = vmax.f32 %v1052, 1e-30
  %v1069 = vmax.f32 %v1055, 1e-30
  %v1070 = vmax.f32 %v1058, 1e-30
  %v1071 = vmax.f32 %v1061, 1e-30
  %v1072 = vmax.f32 %v1064, 1e-30
  %v1073 = vrcp.pop %v1065
  %v1074 = vmul.f32 %v1065, %v1073
  %v1075 = vsub.f32 1.0, %v1074
  %v1076 = vmul.f32 %v1073, %v1075
  %v1077 = vadd.f32 %v1073, %v1076
  %vm1078 = vweird.f32 %v1065
  %vm1079 = vweird.f32 %v1073
  %vm1080 = vmor %vm1078, %vm1079
  %v1081 = vsel %vm1080, %v1073, %v1077
  %v1082 = vand.u32 2147483647, %v1065
  %vm1083 = vcmp.eq.f32.partialorder %v1082, 8.507059e+37
  %v1084 = vand.u32 %v1065, 2147483648
  %v1085 = vor.u32 1.1754944e-38, %v1084
  %v1086 = vsel %vm1083, %v1085, %v1081
  %v1087 = vrcp.pop %v1066
  %v1088 = vmul.f32 %v1066, %v1087
  %v1089 = vsub.f32 1.0, %v1088
  %v1090 = vmul.f32 %v1087, %v1089
  %v1091 = vadd.f32 %v1087, %v1090
  %vm1092 = vweird.f32 %v1066
  %vm1093 = vweird.f32 %v1087
  %vm1094 = vmor %vm1092, %vm1093
  %v1095 = vsel %vm1094, %v1087, %v1091
  %v1096 = vand.u32 2147483647, %v1066
  %vm1097 = vcmp.eq.f32.partialorder %v1096, 8.507059e+37
  %v1098 = vand.u32 %v1066, 2147483648
  %v1099 = vor.u32 1.1754944e-38, %v1098
  %v1100 = vsel %vm1097, %v1099, %v1095
  %v1101 = vrcp.pop %v1067
  %v1102 = vmul.f32 %v1067, %v1101
  %v1103 = vsub.f32 1.0, %v1102
  %v1104 = vmul.f32 %v1101, %v1103
  %v1105 = vadd.f32 %v1101, %v1104
  %vm1106 = vweird.f32 %v1067
  %vm1107 = vweird.f32 %v1101
  %vm1108 = vmor %vm1106, %vm1107
  %v1109 = vsel %vm1108, %v1101, %v1105
  %v1110 = vand.u32 2147483647, %v1067
  %vm1111 = vcmp.eq.f32.partialorder %v1110, 8.507059e+37
  %v1112 = vand.u32 %v1067, 2147483648
  %v1113 = vor.u32 1.1754944e-38, %v1112
  %v1114 = vsel %vm1111, %v1113, %v1109
  %v1115 = vrcp.pop %v1068
  %v1116 = vmul.f32 %v1068, %v1115
  %v1117 = vsub.f32 1.0, %v1116
  %v1118 = vmul.f32 %v1115, %v1117
  %v1119 = vadd.f32 %v1115, %v1118
  %vm1120 = vweird.f32 %v1068
  %vm1121 = vweird.f32 %v1115
  %vm1122 = vmor %vm1120, %vm1121
  %v1123 = vsel %vm1122, %v1115, %v1119
  %v1124 = vand.u32 2147483647, %v1068
  %vm1125 = vcmp.eq.f32.partialorder %v1124, 8.507059e+37
  %v1126 = vand.u32 %v1068, 2147483648
  %v1127 = vor.u32 1.1754944e-38, %v1126
  %v1128 = vsel %vm1125, %v1127, %v1123
  %v1129 = vrcp.pop %v1069
  %v1130 = vmul.f32 %v1069, %v1129
  %v1131 = vsub.f32 1.0, %v1130
  %v1132 = vmul.f32 %v1129, %v1131
  %v1133 = vadd.f32 %v1129, %v1132
  %vm1134 = vweird.f32 %v1069
  %vm1135 = vweird.f32 %v1129
  %vm1136 = vmor %vm1134, %vm1135
  %v1137 = vsel %vm1136, %v1129, %v1133
  %v1138 = vand.u32 2147483647, %v1069
  %vm1139 = vcmp.eq.f32.partialorder %v1138, 8.507059e+37
  %v1140 = vand.u32 %v1069, 2147483648
  %v1141 = vor.u32 1.1754944e-38, %v1140
  %v1142 = vsel %vm1139, %v1141, %v1137
  %v1143 = vrcp.pop %v1070
  %v1144 = vmul.f32 %v1070, %v1143
  %v1145 = vsub.f32 1.0, %v1144
  %v1146 = vmul.f32 %v1143, %v1145
  %v1147 = vadd.f32 %v1143, %v1146
  %vm1148 = vweird.f32 %v1070
  %vm1149 = vweird.f32 %v1143
  %vm1150 = vmor %vm1148, %vm1149
  %v1151 = vsel %vm1150, %v1143, %v1147
  %v1152 = vand.u32 2147483647, %v1070
  %vm1153 = vcmp.eq.f32.partialorder %v1152, 8.507059e+37
  %v1154 = vand.u32 %v1070, 2147483648
  %v1155 = vor.u32 1.1754944e-38, %v1154
  %v1156 = vsel %vm1153, %v1155, %v1151
  %v1157 = vrcp.pop %v1071
  %v1158 = vmul.f32 %v1071, %v1157
  %v1159 = vsub.f32 1.0, %v1158
  %v1160 = vmul.f32 %v1157, %v1159
  %v1161 = vadd.f32 %v1157, %v1160
  %vm1162 = vweird.f32 %v1071
  %vm1163 = vweird.f32 %v1157
  %vm1164 = vmor %vm1162, %vm1163
  %v1165 = vsel %vm1164, %v1157, %v1161
  %v1166 = vand.u32 2147483647, %v1071
  %vm1167 = vcmp.eq.f32.partialorder %v1166, 8.507059e+37
  %v1168 = vand.u32 %v1071, 2147483648
  %v1169 = vor.u32 1.1754944e-38, %v1168
  %v1170 = vsel %vm1167, %v1169, %v1165
  %v1171 = vrcp.pop %v1072
  %v1172 = vmul.f32 %v1072, %v1171
  %v1173 = vsub.f32 1.0, %v1172
  %v1174 = vmul.f32 %v1171, %v1173
  %v1175 = vadd.f32 %v1171, %v1174
  %vm1176 = vweird.f32 %v1072
  %vm1177 = vweird.f32 %v1171
  %vm1178 = vmor %vm1176, %vm1177
  %v1179 = vsel %vm1178, %v1171, %v1175
  %v1180 = vand.u32 2147483647, %v1072
  %vm1181 = vcmp.eq.f32.partialorder %v1180, 8.507059e+37
  %v1182 = vand.u32 %v1072, 2147483648
  %v1183 = vor.u32 1.1754944e-38, %v1182
  %v1184 = vsel %vm1181, %v1183, %v1179
  %v1185 = vmul.f32 %v1026, %v1086
  %v1186 = vmul.f32 %v1028, %v1100
  %v1187 = vmul.f32 %v1030, %v1114
  %v1188 = vmul.f32 %v1032, %v1128
  %v1189 = vmul.f32 %v1034, %v1142
  %v1190 = vmul.f32 %v1036, %v1156
  %v1191 = vmul.f32 %v1038, %v1170
  %v1192 = vmul.f32 %v1040, %v1184
  %1193 = vrot.lane.b32.xlu0 %v82, 112
  %v1194 = vpop.permute.xlu0 %1193
  %1195 = vrot.lane.b32.xlu0 %v85, 112
  %v1196 = vpop.permute.xlu0 %1195
  %1197 = vrot.lane.b32.xlu0 %v88, 112
  %v1198 = vpop.permute.xlu0 %1197
  %1199 = vrot.lane.b32.xlu0 %v91, 112
  %v1200 = vpop.permute.xlu0 %1199
  %1201 = vrot.lane.b32.xlu0 %v94, 112
  %v1202 = vpop.permute.xlu0 %1201
  %1203 = vrot.lane.b32.xlu0 %v97, 112
  %v1204 = vpop.permute.xlu0 %1203
  %1205 = vrot.lane.b32.xlu0 %v100, 112
  %v1206 = vpop.permute.xlu0 %1205
  %1207 = vrot.lane.b32.xlu0 %v103, 112
  %v1208 = vpop.permute.xlu0 %1207
  %v1218 = vsel %vm292, %v1185, 0
  %v1221 = vsel %vm292, %v1186, 0
  %v1224 = vsel %vm292, %v1187, 0
  %v1227 = vsel %vm292, %v1188, 0
  %v1230 = vsel %vm292, %v1189, 0
  %v1233 = vsel %vm292, %v1190, 0
  %v1236 = vsel %vm292, %v1191, 0
  %v1239 = vsel %vm292, %v1192, 0
  %1241 = vmatpush.msra.mxu0 0.0
  %1242 = vmatpush.msra.mxu0 0.0
  %1243 = vmatpush.msra.mxu0 0.0
  %1244 = vmatpush.msra.mxu0 0.0
  %1245 = vmatpush.msra.mxu0 0.0
  %1246 = vmatpush.msra.mxu0 0.0
  %1247 = vmatpush.msra.mxu0 0.0
  %1248 = vmatpush.msra.mxu0 0.0
  %1249 = vmatpush.msra.mxu0 %v1208
  %1250 = vmatpush.msra.mxu0 %v1206
  %1251 = vmatpush.msra.mxu0 %v1204
  %1252 = vmatpush.msra.mxu0 %v1202
  %1253 = vmatpush.msra.mxu0 %v1200
  %1254 = vmatpush.msra.mxu0 %v1198
  %1255 = vmatpush.msra.mxu0 %v1196
  %1256 = vmatpush.msra.mxu0 %v1194
  %1257 = vmatmul.f32.gmra.mxu0 %v1218
  %v1258 = vpop.f32.mrf.mxu0
  %v1259 = vadd.f32 0.0, %v1258
  %1260 = vmatmul.f32.gmra.mxu0 %v1221
  %v1261 = vpop.f32.mrf.mxu0
  %v1262 = vadd.f32 0.0, %v1261
  %1263 = vmatmul.f32.gmra.mxu0 %v1224
  %v1264 = vpop.f32.mrf.mxu0
  %v1265 = vadd.f32 0.0, %v1264
  %1266 = vmatmul.f32.gmra.mxu0 %v1227
  %v1267 = vpop.f32.mrf.mxu0
  %v1268 = vadd.f32 0.0, %v1267
  %1269 = vmatmul.f32.gmra.mxu0 %v1230
  %v1270 = vpop.f32.mrf.mxu0
  %v1271 = vadd.f32 0.0, %v1270
  %1272 = vmatmul.f32.gmra.mxu0 %v1233
  %v1273 = vpop.f32.mrf.mxu0
  %v1274 = vadd.f32 0.0, %v1273
  %1275 = vmatmul.f32.gmra.mxu0 %v1236
  %v1276 = vpop.f32.mrf.mxu0
  %v1277 = vadd.f32 0.0, %v1276
  %1278 = vmatmul.f32.gmra.mxu0 %v1239
  %v1279 = vpop.f32.mrf.mxu0
  %v1280 = vadd.f32 0.0, %v1279
  %1281 = vdwg.mxu0
  %1282 = vset.pattern.permute.xlu0 7
  %1283 = vperm.xlu0 %1282, %v148
  %v1284 = vpop.permute.xlu0 %1283
  %1286 = vset.pattern.permute.xlu0 7
  %1287 = vperm.xlu0 %1286, %v151
  %v1288 = vpop.permute.xlu0 %1287
  %1290 = vset.pattern.permute.xlu0 7
  %1291 = vperm.xlu0 %1290, %v154
  %v1292 = vpop.permute.xlu0 %1291
  %1294 = vset.pattern.permute.xlu0 7
  %1295 = vperm.xlu0 %1294, %v157
  %v1296 = vpop.permute.xlu0 %1295
  %1298 = vset.pattern.permute.xlu0 7
  %1299 = vperm.xlu0 %1298, %v160
  %v1300 = vpop.permute.xlu0 %1299
  %1302 = vset.pattern.permute.xlu0 7
  %1303 = vperm.xlu0 %1302, %v163
  %v1304 = vpop.permute.xlu0 %1303
  %1306 = vset.pattern.permute.xlu0 7
  %1307 = vperm.xlu0 %1306, %v166
  %v1308 = vpop.permute.xlu0 %1307
  %1310 = vset.pattern.permute.xlu0 7
  %1311 = vperm.xlu0 %1310, %v169
  %v1312 = vpop.permute.xlu0 %1311
  %v1314 = vperm.slane %v187, 3
  %v1315 = vadd.f32 %v1284, %v1314
  %v1316 = vadd.f32 %v1288, %v1314
  %v1317 = vadd.f32 %v1292, %v1314
  %v1318 = vadd.f32 %v1296, %v1314
  %v1319 = vadd.f32 %v1300, %v1314
  %v1320 = vadd.f32 %v1304, %v1314
  %v1321 = vadd.f32 %v1308, %v1314
  %v1322 = vadd.f32 %v1312, %v1314
  %vm1323 = vcmp.gt.f32.partialorder %v1315, 0.0
  %vm1324 = vcmp.gt.f32.partialorder %v1316, 0.0
  %vm1325 = vcmp.gt.f32.partialorder %v1317, 0.0
  %vm1326 = vcmp.gt.f32.partialorder %v1318, 0.0
  %vm1327 = vcmp.gt.f32.partialorder %v1319, 0.0
  %vm1328 = vcmp.gt.f32.partialorder %v1320, 0.0
  %vm1329 = vcmp.gt.f32.partialorder %v1321, 0.0
  %vm1330 = vcmp.gt.f32.partialorder %v1322, 0.0
  %v1331 = vmul.f32 %v1315, 0.01
  %v1332 = vmul.f32 %v1316, 0.01
  %v1333 = vmul.f32 %v1317, 0.01
  %v1334 = vmul.f32 %v1318, 0.01
  %v1335 = vmul.f32 %v1319, 0.01
  %v1336 = vmul.f32 %v1320, 0.01
  %v1337 = vmul.f32 %v1321, 0.01
  %v1338 = vmul.f32 %v1322, 0.01
  %v1339 = vsel %vm1323, %v1315, %v1331
  %v1340 = vsel %vm1324, %v1316, %v1332
  %v1341 = vsel %vm1325, %v1317, %v1333
  %v1342 = vsel %vm1326, %v1318, %v1334
  %v1343 = vsel %vm1327, %v1319, %v1335
  %v1344 = vsel %vm1328, %v1320, %v1336
  %v1345 = vsel %vm1329, %v1321, %v1337
  %v1346 = vsel %vm1330, %v1322, %v1338
  %v1347 = vsel %vm203, %v1339, -1e+30
  %v1348 = vsel %vm204, %v1340, -1e+30
  %v1349 = vsel %vm205, %v1341, -1e+30
  %v1350 = vsel %vm206, %v1342, -1e+30
  %v1351 = vsel %vm207, %v1343, -1e+30
  %v1352 = vsel %vm208, %v1344, -1e+30
  %v1353 = vsel %vm209, %v1345, -1e+30
  %v1354 = vsel %vm210, %v1346, -1e+30
  %v1355 = vsel %vm292, %v1347, -inf
  %1356 = vmax.xlane.f32.xlu0 %v1355
  %v1357 = vpop.xlane.xlu0 %1356
  %v1358 = vsel %vm292, %v1348, -inf
  %1359 = vmax.xlane.f32.xlu0 %v1358
  %v1360 = vpop.xlane.xlu0 %1359
  %v1361 = vsel %vm292, %v1349, -inf
  %1362 = vmax.xlane.f32.xlu0 %v1361
  %v1363 = vpop.xlane.xlu0 %1362
  %v1364 = vsel %vm292, %v1350, -inf
  %1365 = vmax.xlane.f32.xlu0 %v1364
  %v1366 = vpop.xlane.xlu0 %1365
  %v1367 = vsel %vm292, %v1351, -inf
  %1368 = vmax.xlane.f32.xlu0 %v1367
  %v1369 = vpop.xlane.xlu0 %1368
  %v1370 = vsel %vm292, %v1352, -inf
  %1371 = vmax.xlane.f32.xlu0 %v1370
  %v1372 = vpop.xlane.xlu0 %1371
  %v1373 = vsel %vm292, %v1353, -inf
  %1374 = vmax.xlane.f32.xlu0 %v1373
  %v1375 = vpop.xlane.xlu0 %1374
  %v1376 = vsel %vm292, %v1354, -inf
  %1377 = vmax.xlane.f32.xlu0 %v1376
  %v1378 = vpop.xlane.xlu0 %1377
  %v1379 = vsub.f32 %v1347, %v1357
  %v1380 = vsub.f32 %v1348, %v1360
  %v1381 = vsub.f32 %v1349, %v1363
  %v1382 = vsub.f32 %v1350, %v1366
  %v1383 = vsub.f32 %v1351, %v1369
  %v1384 = vsub.f32 %v1352, %v1372
  %v1385 = vsub.f32 %v1353, %v1375
  %v1386 = vsub.f32 %v1354, %v1378
  %v1387 = vmul.f32 %v1379, 1.442695
  %v1388 = vpow.pop %v1387
  %v1389 = vmul.f32 %v1380, 1.442695
  %v1390 = vpow.pop %v1389
  %v1391 = vmul.f32 %v1381, 1.442695
  %v1392 = vpow.pop %v1391
  %v1393 = vmul.f32 %v1382, 1.442695
  %v1394 = vpow.pop %v1393
  %v1395 = vmul.f32 %v1383, 1.442695
  %v1396 = vpow.pop %v1395
  %v1397 = vmul.f32 %v1384, 1.442695
  %v1398 = vpow.pop %v1397
  %v1399 = vmul.f32 %v1385, 1.442695
  %v1400 = vpow.pop %v1399
  %v1401 = vmul.f32 %v1386, 1.442695
  %v1402 = vpow.pop %v1401
  %v1403 = vsel %vm292, %v1388, 0.0
  %1404 = vadd.xlane.f32.xlu0 %v1403
  %v1405 = vpop.xlane.xlu0 %1404
  %v1406 = vsel %vm292, %v1390, 0.0
  %1407 = vadd.xlane.f32.xlu0 %v1406
  %v1408 = vpop.xlane.xlu0 %1407
  %v1409 = vsel %vm292, %v1392, 0.0
  %1410 = vadd.xlane.f32.xlu0 %v1409
  %v1411 = vpop.xlane.xlu0 %1410
  %v1412 = vsel %vm292, %v1394, 0.0
  %1413 = vadd.xlane.f32.xlu0 %v1412
  %v1414 = vpop.xlane.xlu0 %1413
  %v1415 = vsel %vm292, %v1396, 0.0
  %1416 = vadd.xlane.f32.xlu0 %v1415
  %v1417 = vpop.xlane.xlu0 %1416
  %v1418 = vsel %vm292, %v1398, 0.0
  %1419 = vadd.xlane.f32.xlu0 %v1418
  %v1420 = vpop.xlane.xlu0 %1419
  %v1421 = vsel %vm292, %v1400, 0.0
  %1422 = vadd.xlane.f32.xlu0 %v1421
  %v1423 = vpop.xlane.xlu0 %1422
  %v1424 = vsel %vm292, %v1402, 0.0
  %1425 = vadd.xlane.f32.xlu0 %v1424
  %v1426 = vpop.xlane.xlu0 %1425
  %v1427 = vmax.f32 %v1405, 1e-30
  %v1428 = vmax.f32 %v1408, 1e-30
  %v1429 = vmax.f32 %v1411, 1e-30
  %v1430 = vmax.f32 %v1414, 1e-30
  %v1431 = vmax.f32 %v1417, 1e-30
  %v1432 = vmax.f32 %v1420, 1e-30
  %v1433 = vmax.f32 %v1423, 1e-30
  %v1434 = vmax.f32 %v1426, 1e-30
  %v1435 = vrcp.pop %v1427
  %v1436 = vmul.f32 %v1427, %v1435
  %v1437 = vsub.f32 1.0, %v1436
  %v1438 = vmul.f32 %v1435, %v1437
  %v1439 = vadd.f32 %v1435, %v1438
  %vm1440 = vweird.f32 %v1427
  %vm1441 = vweird.f32 %v1435
  %vm1442 = vmor %vm1440, %vm1441
  %v1443 = vsel %vm1442, %v1435, %v1439
  %v1444 = vand.u32 2147483647, %v1427
  %vm1445 = vcmp.eq.f32.partialorder %v1444, 8.507059e+37
  %v1446 = vand.u32 %v1427, 2147483648
  %v1447 = vor.u32 1.1754944e-38, %v1446
  %v1448 = vsel %vm1445, %v1447, %v1443
  %v1449 = vrcp.pop %v1428
  %v1450 = vmul.f32 %v1428, %v1449
  %v1451 = vsub.f32 1.0, %v1450
  %v1452 = vmul.f32 %v1449, %v1451
  %v1453 = vadd.f32 %v1449, %v1452
  %vm1454 = vweird.f32 %v1428
  %vm1455 = vweird.f32 %v1449
  %vm1456 = vmor %vm1454, %vm1455
  %v1457 = vsel %vm1456, %v1449, %v1453
  %v1458 = vand.u32 2147483647, %v1428
  %vm1459 = vcmp.eq.f32.partialorder %v1458, 8.507059e+37
  %v1460 = vand.u32 %v1428, 2147483648
  %v1461 = vor.u32 1.1754944e-38, %v1460
  %v1462 = vsel %vm1459, %v1461, %v1457
  %v1463 = vrcp.pop %v1429
  %v1464 = vmul.f32 %v1429, %v1463
  %v1465 = vsub.f32 1.0, %v1464
  %v1466 = vmul.f32 %v1463, %v1465
  %v1467 = vadd.f32 %v1463, %v1466
  %vm1468 = vweird.f32 %v1429
  %vm1469 = vweird.f32 %v1463
  %vm1470 = vmor %vm1468, %vm1469
  %v1471 = vsel %vm1470, %v1463, %v1467
  %v1472 = vand.u32 2147483647, %v1429
  %vm1473 = vcmp.eq.f32.partialorder %v1472, 8.507059e+37
  %v1474 = vand.u32 %v1429, 2147483648
  %v1475 = vor.u32 1.1754944e-38, %v1474
  %v1476 = vsel %vm1473, %v1475, %v1471
  %v1477 = vrcp.pop %v1430
  %v1478 = vmul.f32 %v1430, %v1477
  %v1479 = vsub.f32 1.0, %v1478
  %v1480 = vmul.f32 %v1477, %v1479
  %v1481 = vadd.f32 %v1477, %v1480
  %vm1482 = vweird.f32 %v1430
  %vm1483 = vweird.f32 %v1477
  %vm1484 = vmor %vm1482, %vm1483
  %v1485 = vsel %vm1484, %v1477, %v1481
  %v1486 = vand.u32 2147483647, %v1430
  %vm1487 = vcmp.eq.f32.partialorder %v1486, 8.507059e+37
  %v1488 = vand.u32 %v1430, 2147483648
  %v1489 = vor.u32 1.1754944e-38, %v1488
  %v1490 = vsel %vm1487, %v1489, %v1485
  %v1491 = vrcp.pop %v1431
  %v1492 = vmul.f32 %v1431, %v1491
  %v1493 = vsub.f32 1.0, %v1492
  %v1494 = vmul.f32 %v1491, %v1493
  %v1495 = vadd.f32 %v1491, %v1494
  %vm1496 = vweird.f32 %v1431
  %vm1497 = vweird.f32 %v1491
  %vm1498 = vmor %vm1496, %vm1497
  %v1499 = vsel %vm1498, %v1491, %v1495
  %v1500 = vand.u32 2147483647, %v1431
  %vm1501 = vcmp.eq.f32.partialorder %v1500, 8.507059e+37
  %v1502 = vand.u32 %v1431, 2147483648
  %v1503 = vor.u32 1.1754944e-38, %v1502
  %v1504 = vsel %vm1501, %v1503, %v1499
  %v1505 = vrcp.pop %v1432
  %v1506 = vmul.f32 %v1432, %v1505
  %v1507 = vsub.f32 1.0, %v1506
  %v1508 = vmul.f32 %v1505, %v1507
  %v1509 = vadd.f32 %v1505, %v1508
  %vm1510 = vweird.f32 %v1432
  %vm1511 = vweird.f32 %v1505
  %vm1512 = vmor %vm1510, %vm1511
  %v1513 = vsel %vm1512, %v1505, %v1509
  %v1514 = vand.u32 2147483647, %v1432
  %vm1515 = vcmp.eq.f32.partialorder %v1514, 8.507059e+37
  %v1516 = vand.u32 %v1432, 2147483648
  %v1517 = vor.u32 1.1754944e-38, %v1516
  %v1518 = vsel %vm1515, %v1517, %v1513
  %v1519 = vrcp.pop %v1433
  %v1520 = vmul.f32 %v1433, %v1519
  %v1521 = vsub.f32 1.0, %v1520
  %v1522 = vmul.f32 %v1519, %v1521
  %v1523 = vadd.f32 %v1519, %v1522
  %vm1524 = vweird.f32 %v1433
  %vm1525 = vweird.f32 %v1519
  %vm1526 = vmor %vm1524, %vm1525
  %v1527 = vsel %vm1526, %v1519, %v1523
  %v1528 = vand.u32 2147483647, %v1433
  %vm1529 = vcmp.eq.f32.partialorder %v1528, 8.507059e+37
  %v1530 = vand.u32 %v1433, 2147483648
  %v1531 = vor.u32 1.1754944e-38, %v1530
  %v1532 = vsel %vm1529, %v1531, %v1527
  %v1533 = vrcp.pop %v1434
  %v1534 = vmul.f32 %v1434, %v1533
  %v1535 = vsub.f32 1.0, %v1534
  %v1536 = vmul.f32 %v1533, %v1535
  %v1537 = vadd.f32 %v1533, %v1536
  %vm1538 = vweird.f32 %v1434
  %vm1539 = vweird.f32 %v1533
  %vm1540 = vmor %vm1538, %vm1539
  %v1541 = vsel %vm1540, %v1533, %v1537
  %v1542 = vand.u32 2147483647, %v1434
  %vm1543 = vcmp.eq.f32.partialorder %v1542, 8.507059e+37
  %v1544 = vand.u32 %v1434, 2147483648
  %v1545 = vor.u32 1.1754944e-38, %v1544
  %v1546 = vsel %vm1543, %v1545, %v1541
  %v1547 = vmul.f32 %v1388, %v1448
  %v1548 = vmul.f32 %v1390, %v1462
  %v1549 = vmul.f32 %v1392, %v1476
  %v1550 = vmul.f32 %v1394, %v1490
  %v1551 = vmul.f32 %v1396, %v1504
  %v1552 = vmul.f32 %v1398, %v1518
  %v1553 = vmul.f32 %v1400, %v1532
  %v1554 = vmul.f32 %v1402, %v1546
  %1555 = vrot.lane.b32.xlu0 %v82, 104
  %v1556 = vpop.permute.xlu0 %1555
  %1557 = vrot.lane.b32.xlu0 %v85, 104
  %v1558 = vpop.permute.xlu0 %1557
  %1559 = vrot.lane.b32.xlu0 %v88, 104
  %v1560 = vpop.permute.xlu0 %1559
  %1561 = vrot.lane.b32.xlu0 %v91, 104
  %v1562 = vpop.permute.xlu0 %1561
  %1563 = vrot.lane.b32.xlu0 %v94, 104
  %v1564 = vpop.permute.xlu0 %1563
  %1565 = vrot.lane.b32.xlu0 %v97, 104
  %v1566 = vpop.permute.xlu0 %1565
  %1567 = vrot.lane.b32.xlu0 %v100, 104
  %v1568 = vpop.permute.xlu0 %1567
  %1569 = vrot.lane.b32.xlu0 %v103, 104
  %v1570 = vpop.permute.xlu0 %1569
  %v1580 = vsel %vm292, %v1547, 0
  %v1583 = vsel %vm292, %v1548, 0
  %v1586 = vsel %vm292, %v1549, 0
  %v1589 = vsel %vm292, %v1550, 0
  %v1592 = vsel %vm292, %v1551, 0
  %v1595 = vsel %vm292, %v1552, 0
  %v1598 = vsel %vm292, %v1553, 0
  %v1601 = vsel %vm292, %v1554, 0
  %1603 = vmatpush.msra.mxu0 0.0
  %1604 = vmatpush.msra.mxu0 0.0
  %1605 = vmatpush.msra.mxu0 0.0
  %1606 = vmatpush.msra.mxu0 0.0
  %1607 = vmatpush.msra.mxu0 0.0
  %1608 = vmatpush.msra.mxu0 0.0
  %1609 = vmatpush.msra.mxu0 0.0
  %1610 = vmatpush.msra.mxu0 0.0
  %1611 = vmatpush.msra.mxu0 %v1570
  %1612 = vmatpush.msra.mxu0 %v1568
  %1613 = vmatpush.msra.mxu0 %v1566
  %1614 = vmatpush.msra.mxu0 %v1564
  %1615 = vmatpush.msra.mxu0 %v1562
  %1616 = vmatpush.msra.mxu0 %v1560
  %1617 = vmatpush.msra.mxu0 %v1558
  %1618 = vmatpush.msra.mxu0 %v1556
  %1619 = vmatmul.f32.gmra.mxu0 %v1580
  %v1620 = vpop.f32.mrf.mxu0
  %v1621 = vadd.f32 0.0, %v1620
  %1622 = vmatmul.f32.gmra.mxu0 %v1583
  %v1623 = vpop.f32.mrf.mxu0
  %v1624 = vadd.f32 0.0, %v1623
  %1625 = vmatmul.f32.gmra.mxu0 %v1586
  %v1626 = vpop.f32.mrf.mxu0
  %v1627 = vadd.f32 0.0, %v1626
  %1628 = vmatmul.f32.gmra.mxu0 %v1589
  %v1629 = vpop.f32.mrf.mxu0
  %v1630 = vadd.f32 0.0, %v1629
  %1631 = vmatmul.f32.gmra.mxu0 %v1592
  %v1632 = vpop.f32.mrf.mxu0
  %v1633 = vadd.f32 0.0, %v1632
  %1634 = vmatmul.f32.gmra.mxu0 %v1595
  %v1635 = vpop.f32.mrf.mxu0
  %v1636 = vadd.f32 0.0, %v1635
  %1637 = vmatmul.f32.gmra.mxu0 %v1598
  %v1638 = vpop.f32.mrf.mxu0
  %v1639 = vadd.f32 0.0, %v1638
  %1640 = vmatmul.f32.gmra.mxu0 %v1601
  %v1641 = vpop.f32.mrf.mxu0
  %v1642 = vadd.f32 0.0, %v1641
  %1643 = vdwg.mxu0
  %1652 = vrot.lane.b32.xlu0 %v897, 8
  %v1653 = vpop.permute.xlu0 %1652
  %1654 = vrot.lane.b32.xlu0 %v900, 8
  %v1655 = vpop.permute.xlu0 %1654
  %1656 = vrot.lane.b32.xlu0 %v903, 8
  %v1657 = vpop.permute.xlu0 %1656
  %1658 = vrot.lane.b32.xlu0 %v906, 8
  %v1659 = vpop.permute.xlu0 %1658
  %1660 = vrot.lane.b32.xlu0 %v909, 8
  %v1661 = vpop.permute.xlu0 %1660
  %1662 = vrot.lane.b32.xlu0 %v912, 8
  %v1663 = vpop.permute.xlu0 %1662
  %1664 = vrot.lane.b32.xlu0 %v915, 8
  %v1665 = vpop.permute.xlu0 %1664
  %1666 = vrot.lane.b32.xlu0 %v918, 8
  %v1667 = vpop.permute.xlu0 %1666
  %1684 = vrot.lane.b32.xlu0 %v1259, 16
  %v1685 = vpop.permute.xlu0 %1684
  %1686 = vrot.lane.b32.xlu0 %v1262, 16
  %v1687 = vpop.permute.xlu0 %1686
  %1688 = vrot.lane.b32.xlu0 %v1265, 16
  %v1689 = vpop.permute.xlu0 %1688
  %1690 = vrot.lane.b32.xlu0 %v1268, 16
  %v1691 = vpop.permute.xlu0 %1690
  %1692 = vrot.lane.b32.xlu0 %v1271, 16
  %v1693 = vpop.permute.xlu0 %1692
  %1694 = vrot.lane.b32.xlu0 %v1274, 16
  %v1695 = vpop.permute.xlu0 %1694
  %1696 = vrot.lane.b32.xlu0 %v1277, 16
  %v1697 = vpop.permute.xlu0 %1696
  %1698 = vrot.lane.b32.xlu0 %v1280, 16
  %v1699 = vpop.permute.xlu0 %1698
  %1716 = vrot.lane.b32.xlu0 %v1621, 24
  %v1717 = vpop.permute.xlu0 %1716
  %1718 = vrot.lane.b32.xlu0 %v1624, 24
  %v1719 = vpop.permute.xlu0 %1718
  %1720 = vrot.lane.b32.xlu0 %v1627, 24
  %v1721 = vpop.permute.xlu0 %1720
  %1722 = vrot.lane.b32.xlu0 %v1630, 24
  %v1723 = vpop.permute.xlu0 %1722
  %1724 = vrot.lane.b32.xlu0 %v1633, 24
  %v1725 = vpop.permute.xlu0 %1724
  %1726 = vrot.lane.b32.xlu0 %v1636, 24
  %v1727 = vpop.permute.xlu0 %1726
  %1728 = vrot.lane.b32.xlu0 %v1639, 24
  %v1729 = vpop.permute.xlu0 %1728
  %1730 = vrot.lane.b32.xlu0 %v1642, 24
  %v1731 = vpop.permute.xlu0 %1730
  %vm1740 = vcmask 64512
  %v1741 = vsel %vm1740, %v535, %v1653
  %v1742 = vsel %vm1740, %v538, %v1655
  %v1743 = vsel %vm1740, %v541, %v1657
  %v1744 = vsel %vm1740, %v544, %v1659
  %v1745 = vsel %vm1740, %v547, %v1661
  %v1746 = vsel %vm1740, %v550, %v1663
  %v1747 = vsel %vm1740, %v553, %v1665
  %v1748 = vsel %vm1740, %v556, %v1667
  %v1749 = vsel %vm39, %v1741, %v1685
  %v1750 = vsel %vm39, %v1742, %v1687
  %v1751 = vsel %vm39, %v1743, %v1689
  %v1752 = vsel %vm39, %v1744, %v1691
  %v1753 = vsel %vm39, %v1745, %v1693
  %v1754 = vsel %vm39, %v1746, %v1695
  %v1755 = vsel %vm39, %v1747, %v1697
  %v1756 = vsel %vm39, %v1748, %v1699
  %vm1757 = vcmask 195584
  %v1758 = vsel %vm1757, %v1749, %v1717
  %v1759 = vsel %vm1757, %v1750, %v1719
  %v1760 = vsel %vm1757, %v1751, %v1721
  %v1761 = vsel %vm1757, %v1752, %v1723
  %v1762 = vsel %vm1757, %v1753, %v1725
  %v1763 = vsel %vm1757, %v1754, %v1727
  %v1764 = vsel %vm1757, %v1755, %v1729
  %v1765 = vsel %vm1757, %v1756, %v1731
  %1766 = vst.msk [vmem:[%s4] sm:$0xff] %vm105, %v1758
  %1767 = vst.msk [vmem:[%s4 + $0x8] sm:$0xff] %vm105, %v1759
  %1768 = vst.msk [vmem:[%s4 + $0x10] sm:$0xff] %vm105, %v1760
  %1769 = vst.msk [vmem:[%s4 + $0x18] sm:$0xff] %vm105, %v1761
  %1770 = vst.msk [vmem:[%s4 + $0x20] sm:$0xff] %vm105, %v1762
  %1771 = vst.msk [vmem:[%s4 + $0x28] sm:$0xff] %vm105, %v1763
  %1772 = vst.msk [vmem:[%s4 + $0x30] sm:$0xff] %vm105, %v1764
  %1773 = vst.msk [vmem:[%s4 + $0x38] sm:$0xff] %vm105, %v1765
  // Predicated region
  $region18: #{tpu_custom_call.1} parent=0 // pred_check
    _
  $region19: #{tpu_custom_call.1} parent=0 // pred_check_branch
    %1775 = sbr.rel (0) target = $region21
  $region20: #{tpu_custom_call.1} parent=0 // pred_region
    _
  $region21: #{tpu_custom_call.1} parent=0 // pred_fallthru
    _
  // Predicated region
  $region22: #{tpu_custom_call.1} parent=0 // pred_check
    _
  $region23: #{tpu_custom_call.1} parent=0 // pred_check_branch
    %1777 = sbr.rel (0) target = $region25
  $region24: #{tpu_custom_call.1} parent=0 // pred_region
    _
  $region25: #{tpu_custom_call.1} parent=0 // pred_fallthru
    _

</llo_original>
